<compile_context>
chip_gen: v6e
topology: v6e:2x2x1
jax: 0.10.0
libtpu: 0.0.40
codegen_flags: <defaults>
</compile_context>

<pallas_src>
import functools

import jax
import jax.numpy as jnp
from jax.experimental import pallas as pl
from jax.experimental.pallas import tpu as pltpu


def simple_dnn_kernel(x_ref,
                      w1_ref, b1_ref,
                      w2_ref, b2_ref,
                      w3_ref, b3_ref,
                      w4_ref, b4_ref,
                      o_ref):
    """Fused MLP forward for one batch tile (bf16 matmuls, f32 accumulation)."""
    x = x_ref[...].astype(jnp.bfloat16)                               # (TB, 784)

    h1 = jnp.dot(x, w1_ref[...], preferred_element_type=jnp.float32)
    h1 = jnp.maximum(h1 + b1_ref[...], 0.0)                           # (TB, 128) f32

    h2 = jnp.dot(h1.astype(jnp.bfloat16), w2_ref[...],
                 preferred_element_type=jnp.float32)
    h2 = jnp.maximum(h2 + b2_ref[...], 0.0)                           # (TB, 128) f32

    h3 = jnp.dot(h2.astype(jnp.bfloat16), w3_ref[...],
                 preferred_element_type=jnp.float32)
    h3 = jnp.maximum(h3 + b3_ref[...], 0.0)                           # (TB, 128) lane-padded

    h4 = jnp.dot(h3.astype(jnp.bfloat16), w4_ref[...],
                 preferred_element_type=jnp.float32)
    o_ref[...] = (h4 + b4_ref[...]).astype(o_ref.dtype)               # (TB, 128) lane-dense


def _round_up(n, m):
    return -(-n // m) * m


@functools.partial(jax.jit, static_argnames=("block_b",))
def simple_dnn_forward(x_nchw, params, block_b=None):
    """x_nchw: (B, 1, 28, 28) float32 -> logits (B, 10) float32."""
    B = x_nchw.shape[0]
    (w1, b1), (w2, b2), (w3, b3), (w4, b4) = params
    in_features = w1.shape[0]            # 784
    h1d, h2d, h3d = w1.shape[1], w2.shape[1], w3.shape[1]   # 128, 128, 32
    num_classes = w4.shape[1]            # 10
    NPAD = 128                           # lane-dense width for the 32/10-wide dims

    if block_b is None:
        if B <= 128:
            block_b = 128
        else:
            # >= 2 tiles so the "parallel" batch axis splits across v7x TCs;
            # cap at 1024: amortizes per-grid-step overhead while keeping
            # double-buffered activations (~6.4 MiB f32) well inside VMEM.
            block_b = min(1024, _round_up(-(-B // 2), 128))
    num_tiles = pl.cdiv(B, block_b)

    # Flatten is a free (contiguous) reshape; no pad/convert copy of x in HBM.
    x_flat = x_nchw.reshape(B, in_features).astype(jnp.float32)

    # Tiny one-off weight-side padding so intermediates stay lane-dense.
    w1_b = w1.astype(jnp.bfloat16)                                    # (784, 128)
    w2_b = w2.astype(jnp.bfloat16)                                    # (128, 128)
    w3_p = (jnp.zeros((h2d, NPAD), jnp.bfloat16)
            .at[:, :h3d].set(w3.astype(jnp.bfloat16)))                # (128, 128)
    b3_p = jnp.zeros((1, NPAD), jnp.float32).at[:, :h3d].set(b3)
    w4_p = (jnp.zeros((NPAD, NPAD), jnp.bfloat16)
            .at[:h3d, :num_classes].set(w4.astype(jnp.bfloat16)))     # (128, 128)
    b4_p = jnp.zeros((1, NPAD), jnp.float32).at[:, :num_classes].set(b4)

    # --- advisory cost hint for XLA scheduling -------------------------------
    flops = 2 * B * (in_features * h1d + h1d * h2d + h2d * NPAD + NPAD * NPAD)
    bytes_accessed = (
        x_flat.size * 4
        + (w1_b.size + w2_b.size + w3_p.size + w4_p.size) * 2
        + (b1.size + b2.size + b3_p.size + b4_p.size) * 4
        + B * NPAD * 4)

    const2d = lambda i: (0, 0)   # weights/biases: same block every grid step (resident)

    out = pl.pallas_call(
        simple_dnn_kernel,
        out_shape=jax.ShapeDtypeStruct((B, NPAD), jnp.float32),
        grid=(num_tiles,),
        in_specs=[
            pl.BlockSpec((block_b, in_features), lambda i: (i, 0)),   # activations: tiled
            pl.BlockSpec(w1_b.shape, const2d),
            pl.BlockSpec(b1.shape, const2d),
            pl.BlockSpec(w2_b.shape, const2d),
            pl.BlockSpec(b2.shape, const2d),
            pl.BlockSpec(w3_p.shape, const2d),
            pl.BlockSpec(b3_p.shape, const2d),
            pl.BlockSpec(w4_p.shape, const2d),
            pl.BlockSpec(b4_p.shape, const2d),
        ],
        out_specs=pl.BlockSpec((block_b, NPAD), lambda i: (i, 0)),
        compiler_params=pltpu.CompilerParams(
            dimension_semantics=("parallel",),     # megacore batch split on v7x
            vmem_limit_bytes=32 << 20),            # sized to need; safe on v5e/v6e/v7x
        cost_estimate=pl.CostEstimate(
            flops=flops, transcendentals=0, bytes_accessed=bytes_accessed),
    )(x_flat, w1_b, b1, w2_b, b2, w3_p, b3_p, w4_p, b4_p)

    return out[:, :num_classes]


def init_params(key, input_size=784, num_classes=10):
    """Deterministic init mimicking torch.nn.Linear (U(-1/sqrt(fan_in), +))."""
    dims = [(input_size, 128), (128, 128), (128, 32), (32, num_classes)]
    params = []
    for i, (fan_in, fan_out) in enumerate(dims):
        kw, kb = jax.random.split(jax.random.fold_in(key, i))
        bound = 1.0 / jnp.sqrt(jnp.float32(fan_in))
        w = jax.random.uniform(kw, (fan_in, fan_out), jnp.float32, -bound, bound)
        # biases kept 2D (1, fan_out) for TPU-friendly layout; broadcast over batch.
        b = jax.random.uniform(kb, (1, fan_out), jnp.float32, -bound, bound)
        params.append((w, b))
    return params


if __name__ == "__main__":
    key = jax.random.PRNGKey(0)
    k_x, k_p = jax.random.split(key)

    B = 8
    x = jax.random.normal(k_x, (B, 1, 28, 28), jnp.float32)   # NCHW MNIST-like
    params = init_params(k_p)

    out = simple_dnn_forward(x, params)
    jax.block_until_ready(out)

    # Pure-JAX f32 reference of the PyTorch forward pass.  The kernel runs the
    # matmuls in bf16 with f32 accumulation, so use a loose tolerance.
    x_flat = x.reshape(B, -1)
    ref = x_flat
    for i, (w, b) in enumerate(params):
        ref = ref @ w + b
        if i < 3:
            ref = jnp.maximum(ref, 0.0)

    assert out.shape == (B, 10), f"bad shape {out.shape}"
    assert jnp.allclose(out, ref, atol=5e-2, rtol=5e-2), (
        f"max abs err {jnp.max(jnp.abs(out - ref))}")

    print("KERNEL_OK")
</pallas_src>

<mosaic_0001>
module attributes {stable_mosaic.version = 11 : i64} {
  func.func @simple_dnn_kernel(%arg0: i32, %arg1: memref<128x784xf32, #tpu.memory_space<vmem>>, %arg2: memref<784x128xbf16, #tpu.memory_space<vmem>>, %arg3: memref<1x128xf32, #tpu.memory_space<vmem>>, %arg4: memref<128x128xbf16, #tpu.memory_space<vmem>>, %arg5: memref<1x128xf32, #tpu.memory_space<vmem>>, %arg6: memref<128x128xbf16, #tpu.memory_space<vmem>>, %arg7: memref<1x128xf32, #tpu.memory_space<vmem>>, %arg8: memref<128x128xbf16, #tpu.memory_space<vmem>>, %arg9: memref<1x128xf32, #tpu.memory_space<vmem>>, %arg10: memref<128x128xf32, #tpu.memory_space<vmem>>) attributes {dimension_semantics = [#tpu.dimension_semantics<parallel>], iteration_bounds = array<i64: 1>, scalar_prefetch = 0 : i64, scratch_operands = 0 : i64, tpu.core_type = #tpu.core_type<tc>, window_params = [{transform_indices = @transform_0, window_bounds = array<i64: 128, 784>}, {pipeline_mode = #tpu.pipeline_mode<synchronous>, transform_indices = @transform_1, window_bounds = array<i64: 784, 128>}, {pipeline_mode = #tpu.pipeline_mode<synchronous>, transform_indices = @transform_2, window_bounds = array<i64: 1, 128>}, {pipeline_mode = #tpu.pipeline_mode<synchronous>, transform_indices = @transform_3, window_bounds = array<i64: 128, 128>}, {pipeline_mode = #tpu.pipeline_mode<synchronous>, transform_indices = @transform_4, window_bounds = array<i64: 1, 128>}, {pipeline_mode = #tpu.pipeline_mode<synchronous>, transform_indices = @transform_5, window_bounds = array<i64: 128, 128>}, {pipeline_mode = #tpu.pipeline_mode<synchronous>, transform_indices = @transform_6, window_bounds = array<i64: 1, 128>}, {pipeline_mode = #tpu.pipeline_mode<synchronous>, transform_indices = @transform_7, window_bounds = array<i64: 128, 128>}, {pipeline_mode = #tpu.pipeline_mode<synchronous>, transform_indices = @transform_8, window_bounds = array<i64: 1, 128>}, {transform_indices = @transform_9, window_bounds = array<i64: 128, 128>}]} {
    %c0 = arith.constant 0 : index
    %c0_0 = arith.constant 0 : index
    %0 = vector.load %arg1[%c0, %c0_0] : memref<128x784xf32, #tpu.memory_space<vmem>>, vector<128x784xf32>
    %1 = arith.truncf %0 : vector<128x784xf32> to vector<128x784xbf16>
    %c0_1 = arith.constant 0 : index
    %c0_2 = arith.constant 0 : index
    %2 = vector.load %arg2[%c0_1, %c0_2] : memref<784x128xbf16, #tpu.memory_space<vmem>>, vector<784x128xbf16>
    %cst = arith.constant dense<0.000000e+00> : vector<128x128xf32>
    %3 = tpu.matmul %1, %2, %cst {dimension_numbers = #tpu.dot_dimension_numbers<[1], [0], [0], [1], [0, 0, 1, 1], [], []>} : vector<128x784xbf16>, vector<784x128xbf16>, vector<128x128xf32> -> vector<128x128xf32>
    %c0_3 = arith.constant 0 : index
    %c0_4 = arith.constant 0 : index
    %4 = vector.load %arg3[%c0_3, %c0_4] : memref<1x128xf32, #tpu.memory_space<vmem>>, vector<1x128xf32>
    %5 = vector.broadcast %4 : vector<1x128xf32> to vector<128x128xf32>
    %6 = arith.addf %3, %5 : vector<128x128xf32>
    %cst_5 = arith.constant 0.000000e+00 : f32
    %7 = vector.broadcast %cst_5 : f32 to vector<128x128xf32>
    %8 = arith.maximumf %6, %7 : vector<128x128xf32>
    %9 = arith.truncf %8 : vector<128x128xf32> to vector<128x128xbf16>
    %c0_6 = arith.constant 0 : index
    %c0_7 = arith.constant 0 : index
    %10 = vector.load %arg4[%c0_6, %c0_7] : memref<128x128xbf16, #tpu.memory_space<vmem>>, vector<128x128xbf16>
    %cst_8 = arith.constant dense<0.000000e+00> : vector<128x128xf32>
    %11 = tpu.matmul %9, %10, %cst_8 {dimension_numbers = #tpu.dot_dimension_numbers<[1], [0], [0], [1], [0, 0, 1, 1], [], []>} : vector<128x128xbf16>, vector<128x128xbf16>, vector<128x128xf32> -> vector<128x128xf32>
    %c0_9 = arith.constant 0 : index
    %c0_10 = arith.constant 0 : index
    %12 = vector.load %arg5[%c0_9, %c0_10] : memref<1x128xf32, #tpu.memory_space<vmem>>, vector<1x128xf32>
    %13 = vector.broadcast %12 : vector<1x128xf32> to vector<128x128xf32>
    %14 = arith.addf %11, %13 : vector<128x128xf32>
    %cst_11 = arith.constant 0.000000e+00 : f32
    %15 = vector.broadcast %cst_11 : f32 to vector<128x128xf32>
    %16 = arith.maximumf %14, %15 : vector<128x128xf32>
    %17 = arith.truncf %16 : vector<128x128xf32> to vector<128x128xbf16>
    %c0_12 = arith.constant 0 : index
    %c0_13 = arith.constant 0 : index
    %18 = vector.load %arg6[%c0_12, %c0_13] : memref<128x128xbf16, #tpu.memory_space<vmem>>, vector<128x128xbf16>
    %cst_14 = arith.constant dense<0.000000e+00> : vector<128x128xf32>
    %19 = tpu.matmul %17, %18, %cst_14 {dimension_numbers = #tpu.dot_dimension_numbers<[1], [0], [0], [1], [0, 0, 1, 1], [], []>} : vector<128x128xbf16>, vector<128x128xbf16>, vector<128x128xf32> -> vector<128x128xf32>
    %c0_15 = arith.constant 0 : index
    %c0_16 = arith.constant 0 : index
    %20 = vector.load %arg7[%c0_15, %c0_16] : memref<1x128xf32, #tpu.memory_space<vmem>>, vector<1x128xf32>
    %21 = vector.broadcast %20 : vector<1x128xf32> to vector<128x128xf32>
    %22 = arith.addf %19, %21 : vector<128x128xf32>
    %cst_17 = arith.constant 0.000000e+00 : f32
    %23 = vector.broadcast %cst_17 : f32 to vector<128x128xf32>
    %24 = arith.maximumf %22, %23 : vector<128x128xf32>
    %25 = arith.truncf %24 : vector<128x128xf32> to vector<128x128xbf16>
    %c0_18 = arith.constant 0 : index
    %c0_19 = arith.constant 0 : index
    %26 = vector.load %arg8[%c0_18, %c0_19] : memref<128x128xbf16, #tpu.memory_space<vmem>>, vector<128x128xbf16>
    %cst_20 = arith.constant dense<0.000000e+00> : vector<128x128xf32>
    %27 = tpu.matmul %25, %26, %cst_20 {dimension_numbers = #tpu.dot_dimension_numbers<[1], [0], [0], [1], [0, 0, 1, 1], [], []>} : vector<128x128xbf16>, vector<128x128xbf16>, vector<128x128xf32> -> vector<128x128xf32>
    %c0_21 = arith.constant 0 : index
    %c0_22 = arith.constant 0 : index
    %28 = vector.load %arg9[%c0_21, %c0_22] : memref<1x128xf32, #tpu.memory_space<vmem>>, vector<1x128xf32>
    %29 = vector.broadcast %28 : vector<1x128xf32> to vector<128x128xf32>
    %30 = arith.addf %27, %29 : vector<128x128xf32>
    %c0_23 = arith.constant 0 : index
    %c0_24 = arith.constant 0 : index
    %31 = vector.load %arg10[%c0_23, %c0_24] : memref<128x128xf32, #tpu.memory_space<vmem>>, vector<128x128xf32>
    tpu.vector_store %arg10[%c0_23, %c0_24], %30 {strides = array<i32>} : memref<128x128xf32, #tpu.memory_space<vmem>>, vector<128x128xf32>,
    return
  }
  func.func @transform_0(%arg0: i32) -> (i32, i32) {
    %c0_i32 = arith.constant 0 : i32
    %c0_i32_0 = arith.constant 0 : i32
    return %arg0, %c0_i32 : i32, i32
  }
  func.func @transform_1(%arg0: i32) -> (i32, i32) {
    %c0_i32 = arith.constant 0 : i32
    %c0_i32_0 = arith.constant 0 : i32
    %c0_i32_1 = arith.constant 0 : i32
    return %c0_i32, %c0_i32_0 : i32, i32
  }
  func.func @transform_2(%arg0: i32) -> (i32, i32) {
    %c0_i32 = arith.constant 0 : i32
    %c0_i32_0 = arith.constant 0 : i32
    %c0_i32_1 = arith.constant 0 : i32
    return %c0_i32, %c0_i32_0 : i32, i32
  }
  func.func @transform_3(%arg0: i32) -> (i32, i32) {
    %c0_i32 = arith.constant 0 : i32
    %c0_i32_0 = arith.constant 0 : i32
    %c0_i32_1 = arith.constant 0 : i32
    return %c0_i32, %c0_i32_0 : i32, i32
  }
  func.func @transform_4(%arg0: i32) -> (i32, i32) {
    %c0_i32 = arith.constant 0 : i32
    %c0_i32_0 = arith.constant 0 : i32
    %c0_i32_1 = arith.constant 0 : i32
    return %c0_i32, %c0_i32_0 : i32, i32
  }
  func.func @transform_5(%arg0: i32) -> (i32, i32) {
    %c0_i32 = arith.constant 0 : i32
    %c0_i32_0 = arith.constant 0 : i32
    %c0_i32_1 = arith.constant 0 : i32
    return %c0_i32, %c0_i32_0 : i32, i32
  }
  func.func @transform_6(%arg0: i32) -> (i32, i32) {
    %c0_i32 = arith.constant 0 : i32
    %c0_i32_0 = arith.constant 0 : i32
    %c0_i32_1 = arith.constant 0 : i32
    return %c0_i32, %c0_i32_0 : i32, i32
  }
  func.func @transform_7(%arg0: i32) -> (i32, i32) {
    %c0_i32 = arith.constant 0 : i32
    %c0_i32_0 = arith.constant 0 : i32
    %c0_i32_1 = arith.constant 0 : i32
    return %c0_i32, %c0_i32_0 : i32, i32
  }
  func.func @transform_8(%arg0: i32) -> (i32, i32) {
    %c0_i32 = arith.constant 0 : i32
    %c0_i32_0 = arith.constant 0 : i32
    %c0_i32_1 = arith.constant 0 : i32
    return %c0_i32, %c0_i32_0 : i32, i32
  }
  func.func @transform_9(%arg0: i32) -> (i32, i32) {
    %c0_i32 = arith.constant 0 : i32
    %c0_i32_0 = arith.constant 0 : i32
    return %arg0, %c0_i32 : i32, i32
  }
}

</mosaic_0001>

<llo_original>
// kernel: simple_dnn_forward.1
$region0: #{simple_dnn_forward.1}
  #allocation0 [shape = 'u32[]', space=smem, size = 0x4, offset = 0x4, fixed_abs, tag = 'smem constant byte address 0x4 - core index']
  #allocation1 [shape = 'u32[144,128]{1,0:T(1,128)}', space=vmem, size = 0x12000, scoped, tag = 'internal scratch']
  %s0 = inlined_call_operand.vmem [shape: f32[8,784], index: 0, kind: input, shape index: {}]
  %s1 = inlined_call_operand.vmem [shape: bf16[784,128], index: 1, kind: input, shape index: {}]
  %s2 = inlined_call_operand.vmem [shape: f32[1,128], index: 2, kind: input, shape index: {}]
  %s3 = inlined_call_operand.vmem [shape: bf16[128,128], index: 3, kind: input, shape index: {}]
  %s4 = inlined_call_operand.vmem [shape: f32[1,128], index: 4, kind: input, shape index: {}]
  %s5 = inlined_call_operand.vmem [shape: bf16[128,128], index: 5, kind: input, shape index: {}]
  %s6 = inlined_call_operand.vmem [shape: f32[1,128], index: 6, kind: input, shape index: {}]
  %s7 = inlined_call_operand.vmem [shape: bf16[128,128], index: 7, kind: input, shape index: {}]
  %s8 = inlined_call_operand.vmem [shape: f32[1,128], index: 8, kind: input, shape index: {}]
  %s9 = inlined_call_operand.hbm [shape: f32[8,128], index: 9, kind: output, shape index: {}]
  %s10 = sld [smem:[#allocation0]]
  $region46: #{simple_dnn_forward.1} parent=0
    _
  %s12 = ssub.s32 1, %s10
  %s13 = scalar_select 0, %s12, %s10
  $region1: #{simple_dnn_forward.1} parent=0
    #allocation2 [shape = 'u8[65536]{0}', space=vmem, size = 0x10000, scoped, tag = 'output window, operand 0, single buffered']
    #allocation3 [shape = 's32[1]{0}', space=sflag, size = 0x4, scoped, tag = 'scoped memory for simple_dnn_forward.1']
    %14 = vsyncpa [#allocation3], 0
    // Predicated region
    $region2: #{simple_dnn_forward.1} parent=1 // pred_check
      _
    $region3: #{simple_dnn_forward.1} parent=1 // pred_check_branch
      %16 = sbr.rel (0) target = $region5
    $region4: #{simple_dnn_forward.1} parent=1 // pred_region
      _
    $region5: #{simple_dnn_forward.1} parent=1 // pred_fallthru
      _
    // Predicated region
    $region6: #{simple_dnn_forward.1} parent=1 // pred_check
      _
    $region7: #{simple_dnn_forward.1} parent=1 // pred_check_branch
      %18 = sbr.rel (0) target = $region9
    $region8: #{simple_dnn_forward.1} parent=1 // pred_region
      _
    $region9: #{simple_dnn_forward.1} parent=1 // pred_fallthru
      _
    // Predicated region
    $region10: #{simple_dnn_forward.1} parent=1 // pred_check
      _
    $region11: #{simple_dnn_forward.1} parent=1 // pred_check_branch
      %20 = sbr.rel (0) target = $region13
    $region12: #{simple_dnn_forward.1} parent=1 // pred_region
      _
    $region13: #{simple_dnn_forward.1} parent=1 // pred_fallthru
      _
    // Predicated region
    $region14: #{simple_dnn_forward.1} parent=1 // pred_check
      _
    $region15: #{simple_dnn_forward.1} parent=1 // pred_check_branch
      %22 = sbr.rel (0) target = $region17
    $region16: #{simple_dnn_forward.1} parent=1 // pred_region
      _
    $region17: #{simple_dnn_forward.1} parent=1 // pred_fallthru
      _
    // Predicated region
    $region18: #{simple_dnn_forward.1} parent=1 // pred_check
      _
    $region19: #{simple_dnn_forward.1} parent=1 // pred_check_branch
      %24 = sbr.rel (0) target = $region21
    $region20: #{simple_dnn_forward.1} parent=1 // pred_region
      _
    $region21: #{simple_dnn_forward.1} parent=1 // pred_fallthru
      _
    // Predicated region
    $region22: #{simple_dnn_forward.1} parent=1 // pred_check
      _
    $region23: #{simple_dnn_forward.1} parent=1 // pred_check_branch
      %26 = sbr.rel (0) target = $region25
    $region24: #{simple_dnn_forward.1} parent=1 // pred_region
      _
    $region25: #{simple_dnn_forward.1} parent=1 // pred_fallthru
      _
    // Predicated region
    $region26: #{simple_dnn_forward.1} parent=1 // pred_check
      _
    $region27: #{simple_dnn_forward.1} parent=1 // pred_check_branch
      %28 = sbr.rel (0) target = $region29
    $region28: #{simple_dnn_forward.1} parent=1 // pred_region
      _
    $region29: #{simple_dnn_forward.1} parent=1 // pred_fallthru
      _
    // Predicated region
    $region30: #{simple_dnn_forward.1} parent=1 // pred_check
      _
    $region31: #{simple_dnn_forward.1} parent=1 // pred_check_branch
      %30 = sbr.rel (0) target = $region33
    $region32: #{simple_dnn_forward.1} parent=1 // pred_region
      _
    $region33: #{simple_dnn_forward.1} parent=1 // pred_fallthru
      _
    // Predicated region
    $region34: #{simple_dnn_forward.1} parent=1 // pred_check
      _
    $region35: #{simple_dnn_forward.1} parent=1 // pred_check_branch
      %32 = sbr.rel (0) target = $region37
    $region36: #{simple_dnn_forward.1} parent=1 // pred_region
      _
    $region37: #{simple_dnn_forward.1} parent=1 // pred_fallthru
      _
    %v34 = vld [vmem:[%s0] sm:$0xff]
    %v35 = vld [vmem:[%s0 + $0x8] sm:$0xff]
    %v36 = vld [vmem:[%s0 + $0x10] sm:$0xff]
    %v37 = vld [vmem:[%s0 + $0x18] sm:$0xff]
    %v38 = vld [vmem:[%s0 + $0x20] sm:$0xff]
    %v39 = vld [vmem:[%s0 + $0x28] sm:$0xff]
    %v40 = vld [vmem:[%s0 + $0x30] sm:$0xff]
    %v41 = vld [vmem:[%s0 + $0x38] sm:$0xff]
    %v42 = vld [vmem:[%s0 + $0x40] sm:$0xff]
    %v43 = vld [vmem:[%s0 + $0x48] sm:$0xff]
    %v44 = vld [vmem:[%s0 + $0x50] sm:$0xff]
    %v45 = vld [vmem:[%s0 + $0x58] sm:$0xff]
    %v46 = vld [vmem:[%s0 + $0x60] sm:$0xff]
    %v47 = vld [vmem:[%s0 + $0x68] sm:$0xff]
    %v48 = vld [vmem:[%s0 + $0x70] sm:$0xff]
    %v49 = vld [vmem:[%s0 + $0x78] sm:$0xff]
    %v50 = vld [vmem:[%s0 + $0x80] sm:$0xff]
    %v51 = vld [vmem:[%s0 + $0x88] sm:$0xff]
    %v52 = vld [vmem:[%s0 + $0x90] sm:$0xff]
    %v53 = vld [vmem:[%s0 + $0x98] sm:$0xff]
    %v54 = vld [vmem:[%s0 + $0xa0] sm:$0xff]
    %v55 = vld [vmem:[%s0 + $0xa8] sm:$0xff]
    %v56 = vld [vmem:[%s0 + $0xb0] sm:$0xff]
    %v57 = vld [vmem:[%s0 + $0xb8] sm:$0xff]
    %v58 = vld [vmem:[%s0 + $0xc0] sm:$0xff]
    %v59 = vld [vmem:[%s0 + $0xc8] sm:$0xff]
    %v60 = vld [vmem:[%s0 + $0xd0] sm:$0xff]
    %v61 = vld [vmem:[%s0 + $0xd8] sm:$0xff]
    %v62 = vld [vmem:[%s0 + $0xe0] sm:$0xff]
    %v63 = vld [vmem:[%s0 + $0xe8] sm:$0xff]
    %v64 = vld [vmem:[%s0 + $0xf0] sm:$0xff]
    %v65 = vld [vmem:[%s0 + $0xf8] sm:$0xff]
    %v66 = vld [vmem:[%s0 + $0x100] sm:$0xff]
    %v67 = vld [vmem:[%s0 + $0x108] sm:$0xff]
    %v68 = vld [vmem:[%s0 + $0x110] sm:$0xff]
    %v69 = vld [vmem:[%s0 + $0x118] sm:$0xff]
    %v70 = vld [vmem:[%s0 + $0x120] sm:$0xff]
    %v71 = vld [vmem:[%s0 + $0x128] sm:$0xff]
    %v72 = vld [vmem:[%s0 + $0x130] sm:$0xff]
    %v73 = vld [vmem:[%s0 + $0x138] sm:$0xff]
    %v74 = vld [vmem:[%s0 + $0x140] sm:$0xff]
    %v75 = vld [vmem:[%s0 + $0x148] sm:$0xff]
    %v76 = vld [vmem:[%s0 + $0x150] sm:$0xff]
    %v77 = vld [vmem:[%s0 + $0x158] sm:$0xff]
    %v78 = vld [vmem:[%s0 + $0x160] sm:$0xff]
    %v79 = vld [vmem:[%s0 + $0x168] sm:$0xff]
    %v80 = vld [vmem:[%s0 + $0x170] sm:$0xff]
    %v81 = vld [vmem:[%s0 + $0x178] sm:$0xff]
    %v82 = vld [vmem:[%s0 + $0x180] sm:$0xff]
    %v83 = vld [vmem:[%s0 + $0x188] sm:$0xff]
    %v84 = vld [vmem:[%s0 + $0x190] sm:$0xff]
    %v85 = vld [vmem:[%s0 + $0x198] sm:$0xff]
    %v86 = vld [vmem:[%s0 + $0x1a0] sm:$0xff]
    %v87 = vld [vmem:[%s0 + $0x1a8] sm:$0xff]
    %v88 = vld [vmem:[%s0 + $0x1b0] sm:$0xff]
    %v89 = vld [vmem:[%s0 + $0x1b8] sm:$0xff]
    %v90 = vld [vmem:[%s0 + $0x1c0] sm:$0xff]
    %v91 = vld [vmem:[%s0 + $0x1c8] sm:$0xff]
    %v92 = vld [vmem:[%s0 + $0x1d0] sm:$0xff]
    %v93 = vld [vmem:[%s0 + $0x1d8] sm:$0xff]
    %v94 = vld [vmem:[%s0 + $0x1e0] sm:$0xff]
    %v95 = vld [vmem:[%s0 + $0x1e8] sm:$0xff]
    %v96 = vld [vmem:[%s0 + $0x1f0] sm:$0xff]
    %v97 = vld [vmem:[%s0 + $0x1f8] sm:$0xff]
    %v98 = vld [vmem:[%s0 + $0x200] sm:$0xff]
    %v99 = vld [vmem:[%s0 + $0x208] sm:$0xff]
    %v100 = vld [vmem:[%s0 + $0x210] sm:$0xff]
    %v101 = vld [vmem:[%s0 + $0x218] sm:$0xff]
    %v102 = vld [vmem:[%s0 + $0x220] sm:$0xff]
    %v103 = vld [vmem:[%s0 + $0x228] sm:$0xff]
    %v104 = vld [vmem:[%s0 + $0x230] sm:$0xff]
    %v105 = vld [vmem:[%s0 + $0x238] sm:$0xff]
    %v106 = vld [vmem:[%s0 + $0x240] sm:$0xff]
    %v107 = vld [vmem:[%s0 + $0x248] sm:$0xff]
    %v108 = vld [vmem:[%s0 + $0x250] sm:$0xff]
    %v109 = vld [vmem:[%s0 + $0x258] sm:$0xff]
    %v110 = vld [vmem:[%s0 + $0x260] sm:$0xff]
    %v111 = vld [vmem:[%s0 + $0x268] sm:$0xff]
    %v112 = vld [vmem:[%s0 + $0x270] sm:$0xff]
    %v113 = vld [vmem:[%s0 + $0x278] sm:$0xff]
    %v114 = vld [vmem:[%s0 + $0x280] sm:$0xff]
    %v115 = vld [vmem:[%s0 + $0x288] sm:$0xff]
    %v116 = vld [vmem:[%s0 + $0x290] sm:$0xff]
    %v117 = vld [vmem:[%s0 + $0x298] sm:$0xff]
    %v118 = vld [vmem:[%s0 + $0x2a0] sm:$0xff]
    %v119 = vld [vmem:[%s0 + $0x2a8] sm:$0xff]
    %v120 = vld [vmem:[%s0 + $0x2b0] sm:$0xff]
    %v121 = vld [vmem:[%s0 + $0x2b8] sm:$0xff]
    %v122 = vld [vmem:[%s0 + $0x2c0] sm:$0xff]
    %v123 = vld [vmem:[%s0 + $0x2c8] sm:$0xff]
    %v124 = vld [vmem:[%s0 + $0x2d0] sm:$0xff]
    %v125 = vld [vmem:[%s0 + $0x2d8] sm:$0xff]
    %v126 = vld [vmem:[%s0 + $0x2e0] sm:$0xff]
    %v127 = vld [vmem:[%s0 + $0x2e8] sm:$0xff]
    %v128 = vld [vmem:[%s0 + $0x2f0] sm:$0xff]
    %v129 = vld [vmem:[%s0 + $0x2f8] sm:$0xff]
    %v130 = vld [vmem:[%s0 + $0x300] sm:$0xff]
    %v131 = vld [vmem:[%s0 + $0x308] sm:$0xff]
    %v132 = vld [vmem:[%s0 + $0x310] sm:$0xff]
    %v133 = vld [vmem:[%s0 + $0x318] sm:$0xff]
    %v134 = vld [vmem:[%s0 + $0x320] sm:$0xff]
    %v135 = vld [vmem:[%s0 + $0x328] sm:$0xff]
    %v136 = vld [vmem:[%s0 + $0x330] sm:$0xff]
    %v137 = vld [vmem:[%s0 + $0x338] sm:$0xff]
    %v138 = vld [vmem:[%s0 + $0x340] sm:$0xff]
    %v139 = vld [vmem:[%s0 + $0x348] sm:$0xff]
    %v140 = vld [vmem:[%s0 + $0x350] sm:$0xff]
    %v141 = vld [vmem:[%s0 + $0x358] sm:$0xff]
    %v142 = vld [vmem:[%s0 + $0x360] sm:$0xff]
    %v143 = vld [vmem:[%s0 + $0x368] sm:$0xff]
    %v144 = vld [vmem:[%s0 + $0x370] sm:$0xff]
    %v145 = vld [vmem:[%s0 + $0x378] sm:$0xff]
    %v146 = vpack.c.bf16 %v41, %v34
    %v147 = vpack.c.bf16 %v42, %v35
    %v148 = vpack.c.bf16 %v43, %v36
    %v149 = vpack.c.bf16 %v44, %v37
    %v150 = vpack.c.bf16 %v45, %v38
    %v151 = vpack.c.bf16 %v46, %v39
    %v152 = vpack.c.bf16 %v47, %v40
    %v153 = vpack.c.bf16 %v55, %v48
    %v154 = vpack.c.bf16 %v56, %v49
    %v155 = vpack.c.bf16 %v57, %v50
    %v156 = vpack.c.bf16 %v58, %v51
    %v157 = vpack.c.bf16 %v59, %v52
    %v158 = vpack.c.bf16 %v60, %v53
    %v159 = vpack.c.bf16 %v61, %v54
    %v160 = vpack.c.bf16 %v69, %v62
    %v161 = vpack.c.bf16 %v70, %v63
    %v162 = vpack.c.bf16 %v71, %v64
    %v163 = vpack.c.bf16 %v72, %v65
    %v164 = vpack.c.bf16 %v73, %v66
    %v165 = vpack.c.bf16 %v74, %v67
    %v166 = vpack.c.bf16 %v75, %v68
    %v167 = vpack.c.bf16 %v83, %v76
    %v168 = vpack.c.bf16 %v84, %v77
    %v169 = vpack.c.bf16 %v85, %v78
    %v170 = vpack.c.bf16 %v86, %v79
    %v171 = vpack.c.bf16 %v87, %v80
    %v172 = vpack.c.bf16 %v88, %v81
    %v173 = vpack.c.bf16 %v89, %v82
    %v174 = vpack.c.bf16 %v97, %v90
    %v175 = vpack.c.bf16 %v98, %v91
    %v176 = vpack.c.bf16 %v99, %v92
    %v177 = vpack.c.bf16 %v100, %v93
    %v178 = vpack.c.bf16 %v101, %v94
    %v179 = vpack.c.bf16 %v102, %v95
    %v180 = vpack.c.bf16 %v103, %v96
    %v181 = vpack.c.bf16 %v111, %v104
    %v182 = vpack.c.bf16 %v112, %v105
    %v183 = vpack.c.bf16 %v113, %v106
    %v184 = vpack.c.bf16 %v114, %v107
    %v185 = vpack.c.bf16 %v115, %v108
    %v186 = vpack.c.bf16 %v116, %v109
    %v187 = vpack.c.bf16 %v117, %v110
    %v188 = vpack.c.bf16 %v125, %v118
    %v189 = vpack.c.bf16 %v126, %v119
    %v190 = vpack.c.bf16 %v127, %v120
    %v191 = vpack.c.bf16 %v128, %v121
    %v192 = vpack.c.bf16 %v129, %v122
    %v193 = vpack.c.bf16 %v130, %v123
    %v194 = vpack.c.bf16 %v131, %v124
    %v195 = vpack.c.bf16 %v139, %v132
    %v196 = vpack.c.bf16 %v140, %v133
    %v197 = vpack.c.bf16 %v141, %v134
    %v198 = vpack.c.bf16 %v142, %v135
    %v199 = vpack.c.bf16 %v143, %v136
    %v200 = vpack.c.bf16 %v144, %v137
    %v201 = vpack.c.bf16 %v145, %v138
    %v202 = vld [vmem:[%s1] sm:$0xf]
    %v203 = vld [vmem:[%s1 + $0x4] sm:$0xf]
    %v204 = vld [vmem:[%s1 + $0x8] sm:$0xf]
    %v205 = vld [vmem:[%s1 + $0xc] sm:$0xf]
    %v206 = vld [vmem:[%s1 + $0x10] sm:$0xf]
    %v207 = vld [vmem:[%s1 + $0x14] sm:$0xf]
    %v208 = vld [vmem:[%s1 + $0x18] sm:$0xf]
    %v209 = vld [vmem:[%s1 + $0x1c] sm:$0xf]
    %v210 = vld [vmem:[%s1 + $0x20] sm:$0xf]
    %v211 = vld [vmem:[%s1 + $0x24] sm:$0xf]
    %v212 = vld [vmem:[%s1 + $0x28] sm:$0xf]
    %v213 = vld [vmem:[%s1 + $0x2c] sm:$0xf]
    %v214 = vld [vmem:[%s1 + $0x30] sm:$0xf]
    %v215 = vld [vmem:[%s1 + $0x34] sm:$0xf]
    %v216 = vld [vmem:[%s1 + $0x38] sm:$0xf]
    %v217 = vld [vmem:[%s1 + $0x3c] sm:$0xf]
    %v218 = vld [vmem:[%s1 + $0x40] sm:$0xf]
    %v219 = vld [vmem:[%s1 + $0x44] sm:$0xf]
    %v220 = vld [vmem:[%s1 + $0x48] sm:$0xf]
    %v221 = vld [vmem:[%s1 + $0x4c] sm:$0xf]
    %v222 = vld [vmem:[%s1 + $0x50] sm:$0xf]
    %v223 = vld [vmem:[%s1 + $0x54] sm:$0xf]
    %v224 = vld [vmem:[%s1 + $0x58] sm:$0xf]
    %v225 = vld [vmem:[%s1 + $0x5c] sm:$0xf]
    %v226 = vld [vmem:[%s1 + $0x60] sm:$0xf]
    %v227 = vld [vmem:[%s1 + $0x64] sm:$0xf]
    %v228 = vld [vmem:[%s1 + $0x68] sm:$0xf]
    %v229 = vld [vmem:[%s1 + $0x6c] sm:$0xf]
    %v230 = vld [vmem:[%s1 + $0x70] sm:$0xf]
    %v231 = vld [vmem:[%s1 + $0x74] sm:$0xf]
    %v232 = vld [vmem:[%s1 + $0x78] sm:$0xf]
    %v233 = vld [vmem:[%s1 + $0x7c] sm:$0xf]
    %v234 = vld [vmem:[%s1 + $0x80] sm:$0xf]
    %v235 = vld [vmem:[%s1 + $0x84] sm:$0xf]
    %v236 = vld [vmem:[%s1 + $0x88] sm:$0xf]
    %v237 = vld [vmem:[%s1 + $0x8c] sm:$0xf]
    %v238 = vld [vmem:[%s1 + $0x90] sm:$0xf]
    %v239 = vld [vmem:[%s1 + $0x94] sm:$0xf]
    %v240 = vld [vmem:[%s1 + $0x98] sm:$0xf]
    %v241 = vld [vmem:[%s1 + $0x9c] sm:$0xf]
    %v242 = vld [vmem:[%s1 + $0xa0] sm:$0xf]
    %v243 = vld [vmem:[%s1 + $0xa4] sm:$0xf]
    %v244 = vld [vmem:[%s1 + $0xa8] sm:$0xf]
    %v245 = vld [vmem:[%s1 + $0xac] sm:$0xf]
    %v246 = vld [vmem:[%s1 + $0xb0] sm:$0xf]
    %v247 = vld [vmem:[%s1 + $0xb4] sm:$0xf]
    %v248 = vld [vmem:[%s1 + $0xb8] sm:$0xf]
    %v249 = vld [vmem:[%s1 + $0xbc] sm:$0xf]
    %v250 = vld [vmem:[%s1 + $0xc0] sm:$0xf]
    %v251 = vld [vmem:[%s1 + $0xc4] sm:$0xf]
    %v252 = vld [vmem:[%s1 + $0xc8] sm:$0xf]
    %v253 = vld [vmem:[%s1 + $0xcc] sm:$0xf]
    %v254 = vld [vmem:[%s1 + $0xd0] sm:$0xf]
    %v255 = vld [vmem:[%s1 + $0xd4] sm:$0xf]
    %v256 = vld [vmem:[%s1 + $0xd8] sm:$0xf]
    %v257 = vld [vmem:[%s1 + $0xdc] sm:$0xf]
    %v258 = vld [vmem:[%s1 + $0xe0] sm:$0xf]
    %v259 = vld [vmem:[%s1 + $0xe4] sm:$0xf]
    %v260 = vld [vmem:[%s1 + $0xe8] sm:$0xf]
    %v261 = vld [vmem:[%s1 + $0xec] sm:$0xf]
    %v262 = vld [vmem:[%s1 + $0xf0] sm:$0xf]
    %v263 = vld [vmem:[%s1 + $0xf4] sm:$0xf]
    %v264 = vld [vmem:[%s1 + $0xf8] sm:$0xf]
    %v265 = vld [vmem:[%s1 + $0xfc] sm:$0xf]
    %v266 = vld [vmem:[%s1 + $0x100] sm:$0xf]
    %v267 = vld [vmem:[%s1 + $0x104] sm:$0xf]
    %v268 = vld [vmem:[%s1 + $0x108] sm:$0xf]
    %v269 = vld [vmem:[%s1 + $0x10c] sm:$0xf]
    %v270 = vld [vmem:[%s1 + $0x110] sm:$0xf]
    %v271 = vld [vmem:[%s1 + $0x114] sm:$0xf]
    %v272 = vld [vmem:[%s1 + $0x118] sm:$0xf]
    %v273 = vld [vmem:[%s1 + $0x11c] sm:$0xf]
    %v274 = vld [vmem:[%s1 + $0x120] sm:$0xf]
    %v275 = vld [vmem:[%s1 + $0x124] sm:$0xf]
    %v276 = vld [vmem:[%s1 + $0x128] sm:$0xf]
    %v277 = vld [vmem:[%s1 + $0x12c] sm:$0xf]
    %v278 = vld [vmem:[%s1 + $0x130] sm:$0xf]
    %v279 = vld [vmem:[%s1 + $0x134] sm:$0xf]
    %v280 = vld [vmem:[%s1 + $0x138] sm:$0xf]
    %v281 = vld [vmem:[%s1 + $0x13c] sm:$0xf]
    %v282 = vld [vmem:[%s1 + $0x140] sm:$0xf]
    %v283 = vld [vmem:[%s1 + $0x144] sm:$0xf]
    %v284 = vld [vmem:[%s1 + $0x148] sm:$0xf]
    %v285 = vld [vmem:[%s1 + $0x14c] sm:$0xf]
    %v286 = vld [vmem:[%s1 + $0x150] sm:$0xf]
    %v287 = vld [vmem:[%s1 + $0x154] sm:$0xf]
    %v288 = vld [vmem:[%s1 + $0x158] sm:$0xf]
    %v289 = vld [vmem:[%s1 + $0x15c] sm:$0xf]
    %v290 = vld [vmem:[%s1 + $0x160] sm:$0xf]
    %v291 = vld [vmem:[%s1 + $0x164] sm:$0xf]
    %v292 = vld [vmem:[%s1 + $0x168] sm:$0xf]
    %v293 = vld [vmem:[%s1 + $0x16c] sm:$0xf]
    %v294 = vld [vmem:[%s1 + $0x170] sm:$0xf]
    %v295 = vld [vmem:[%s1 + $0x174] sm:$0xf]
    %v296 = vld [vmem:[%s1 + $0x178] sm:$0xf]
    %v297 = vld [vmem:[%s1 + $0x17c] sm:$0xf]
    %v298 = vld [vmem:[%s1 + $0x180] sm:$0xf]
    %v299 = vld [vmem:[%s1 + $0x184] sm:$0xf]
    %v300 = vld [vmem:[%s2] sm:$0x1]
    %v302 = vlaneseq
    %v303 = vshrl.u32 %v302, 7
    %v304 = vsub.s32 0, %v303
    %v305 = vrot.slane %v300, %v304
    %v405 = vunpack.c.l.b16 %v202
    %v406 = vunpack.c.l.b16 %v203
    %v407 = vunpack.c.l.b16 %v204
    %v408 = vunpack.c.l.b16 %v205
    %v409 = vunpack.c.l.b16 %v206
    %v410 = vunpack.c.l.b16 %v207
    %v411 = vunpack.c.l.b16 %v208
    %v412 = vunpack.c.l.b16 %v209
    %v413 = vunpack.c.l.b16 %v210
    %v414 = vunpack.c.l.b16 %v211
    %v415 = vunpack.c.l.b16 %v212
    %v416 = vunpack.c.l.b16 %v213
    %v417 = vunpack.c.l.b16 %v214
    %v418 = vunpack.c.l.b16 %v215
    %v419 = vunpack.c.l.b16 %v216
    %v420 = vunpack.c.l.b16 %v217
    %v421 = vunpack.c.l.b16 %v218
    %v422 = vunpack.c.l.b16 %v219
    %v423 = vunpack.c.l.b16 %v220
    %v424 = vunpack.c.l.b16 %v221
    %v425 = vunpack.c.l.b16 %v222
    %v426 = vunpack.c.l.b16 %v223
    %v427 = vunpack.c.l.b16 %v224
    %v428 = vunpack.c.l.b16 %v225
    %v429 = vunpack.c.l.b16 %v226
    %v430 = vunpack.c.l.b16 %v227
    %v431 = vunpack.c.l.b16 %v228
    %v432 = vunpack.c.l.b16 %v229
    %v433 = vunpack.c.l.b16 %v230
    %v434 = vunpack.c.l.b16 %v231
    %v435 = vunpack.c.l.b16 %v232
    %v436 = vunpack.c.l.b16 %v233
    %v437 = vunpack.c.l.b16 %v234
    %v438 = vunpack.c.l.b16 %v235
    %v439 = vunpack.c.l.b16 %v236
    %v440 = vunpack.c.l.b16 %v237
    %v441 = vunpack.c.l.b16 %v238
    %v442 = vunpack.c.l.b16 %v239
    %v443 = vunpack.c.l.b16 %v240
    %v444 = vunpack.c.l.b16 %v241
    %v445 = vunpack.c.l.b16 %v242
    %v446 = vunpack.c.l.b16 %v243
    %v447 = vunpack.c.l.b16 %v244
    %v448 = vunpack.c.l.b16 %v245
    %v449 = vunpack.c.l.b16 %v246
    %v450 = vunpack.c.l.b16 %v247
    %v451 = vunpack.c.l.b16 %v248
    %v452 = vunpack.c.l.b16 %v249
    %v453 = vunpack.c.l.b16 %v250
    %v454 = vunpack.c.l.b16 %v251
    %v455 = vunpack.c.l.b16 %v252
    %v456 = vunpack.c.l.b16 %v253
    %v457 = vunpack.c.l.b16 %v254
    %v458 = vunpack.c.l.b16 %v255
    %v459 = vunpack.c.l.b16 %v256
    %v460 = vunpack.c.l.b16 %v257
    %v461 = vunpack.c.l.b16 %v258
    %v462 = vunpack.c.l.b16 %v259
    %v463 = vunpack.c.l.b16 %v260
    %v464 = vunpack.c.l.b16 %v261
    %v465 = vunpack.c.l.b16 %v262
    %v466 = vunpack.c.l.b16 %v263
    %v467 = vunpack.c.l.b16 %v264
    %v468 = vunpack.c.l.b16 %v265
    %v469 = vunpack.c.l.b16 %v266
    %v470 = vunpack.c.l.b16 %v267
    %v471 = vunpack.c.l.b16 %v268
    %v472 = vunpack.c.l.b16 %v269
    %v473 = vunpack.c.l.b16 %v270
    %v474 = vunpack.c.l.b16 %v271
    %v475 = vunpack.c.l.b16 %v272
    %v476 = vunpack.c.l.b16 %v273
    %v477 = vunpack.c.l.b16 %v274
    %v478 = vunpack.c.l.b16 %v275
    %v479 = vunpack.c.l.b16 %v276
    %v480 = vunpack.c.l.b16 %v277
    %v481 = vunpack.c.l.b16 %v278
    %v482 = vunpack.c.l.b16 %v279
    %v483 = vunpack.c.l.b16 %v280
    %v484 = vunpack.c.l.b16 %v281
    %v485 = vunpack.c.l.b16 %v282
    %v486 = vunpack.c.l.b16 %v283
    %v487 = vunpack.c.l.b16 %v284
    %v488 = vunpack.c.l.b16 %v285
    %v489 = vunpack.c.l.b16 %v286
    %v490 = vunpack.c.l.b16 %v287
    %v491 = vunpack.c.l.b16 %v288
    %v492 = vunpack.c.l.b16 %v289
    %v493 = vunpack.c.l.b16 %v290
    %v494 = vunpack.c.l.b16 %v291
    %v495 = vunpack.c.l.b16 %v292
    %v496 = vunpack.c.l.b16 %v293
    %v497 = vunpack.c.l.b16 %v294
    %v498 = vunpack.c.l.b16 %v295
    %v499 = vunpack.c.l.b16 %v296
    %v500 = vunpack.c.l.b16 %v297
    %v501 = vunpack.c.l.b16 %v298
    %v502 = vunpack.c.l.b16 %v299
    %v503 = vpack.c.b16 %v406, %v405
    %v504 = vpack.c.b16 %v408, %v407
    %v505 = vpack.c.b16 %v410, %v409
    %v506 = vpack.c.b16 %v412, %v411
    %v507 = vpack.c.b16 %v414, %v413
    %v508 = vpack.c.b16 %v416, %v415
    %v509 = vpack.c.b16 %v418, %v417
    %v510 = vpack.c.b16 %v420, %v419
    %v511 = vpack.c.b16 %v422, %v421
    %v512 = vpack.c.b16 %v424, %v423
    %v513 = vpack.c.b16 %v426, %v425
    %v514 = vpack.c.b16 %v428, %v427
    %v515 = vpack.c.b16 %v430, %v429
    %v516 = vpack.c.b16 %v432, %v431
    %v517 = vpack.c.b16 %v434, %v433
    %v518 = vpack.c.b16 %v436, %v435
    %v519 = vpack.c.b16 %v438, %v437
    %v520 = vpack.c.b16 %v440, %v439
    %v521 = vpack.c.b16 %v442, %v441
    %v522 = vpack.c.b16 %v444, %v443
    %v523 = vpack.c.b16 %v446, %v445
    %v524 = vpack.c.b16 %v448, %v447
    %v525 = vpack.c.b16 %v450, %v449
    %v526 = vpack.c.b16 %v452, %v451
    %v527 = vpack.c.b16 %v454, %v453
    %v528 = vpack.c.b16 %v456, %v455
    %v529 = vpack.c.b16 %v458, %v457
    %v530 = vpack.c.b16 %v460, %v459
    %v531 = vpack.c.b16 %v462, %v461
    %v532 = vpack.c.b16 %v464, %v463
    %v533 = vpack.c.b16 %v466, %v465
    %v534 = vpack.c.b16 %v468, %v467
    %v535 = vpack.c.b16 %v470, %v469
    %v536 = vpack.c.b16 %v472, %v471
    %v537 = vpack.c.b16 %v474, %v473
    %v538 = vpack.c.b16 %v476, %v475
    %v539 = vpack.c.b16 %v478, %v477
    %v540 = vpack.c.b16 %v480, %v479
    %v541 = vpack.c.b16 %v482, %v481
    %v542 = vpack.c.b16 %v484, %v483
    %v543 = vpack.c.b16 %v486, %v485
    %v544 = vpack.c.b16 %v488, %v487
    %v545 = vpack.c.b16 %v490, %v489
    %v546 = vpack.c.b16 %v492, %v491
    %v547 = vpack.c.b16 %v494, %v493
    %v548 = vpack.c.b16 %v496, %v495
    %v549 = vpack.c.b16 %v498, %v497
    %v550 = vpack.c.b16 %v500, %v499
    %v551 = vpack.c.b16 %v502, %v501
    %vm601 = vcmask 130048
    %v603 = vsel %vm601, %v152, 0
    %v606 = vsel %vm601, %v159, 0
    %v609 = vsel %vm601, %v166, 0
    %v612 = vsel %vm601, %v173, 0
    %v615 = vsel %vm601, %v180, 0
    %v618 = vsel %vm601, %v187, 0
    %v621 = vsel %vm601, %v194, 0
    %v624 = vsel %vm601, %v201, 0
    %626 = vmatprep.subr.bf16.mxu0 0
    %627 = vmatpush1.bf16.msra.mxu0 %v510
    %628 = vmatprep.subr.bf16.mxu0 0
    %629 = vmatpush1.bf16.msra.mxu0 %v509
    %630 = vmatprep.subr.bf16.mxu0 0
    %631 = vmatpush1.bf16.msra.mxu0 %v508
    %632 = vmatprep.subr.bf16.mxu0 0
    %633 = vmatpush1.bf16.msra.mxu0 %v507
    %634 = vmatprep.subr.bf16.mxu0 0
    %635 = vmatpush1.bf16.msra.mxu0 %v506
    %636 = vmatprep.subr.bf16.mxu0 0
    %637 = vmatpush1.bf16.msra.mxu0 %v505
    %638 = vmatprep.subr.bf16.mxu0 0
    %639 = vmatpush1.bf16.msra.mxu0 %v504
    %640 = vmatprep.subr.bf16.mxu0 0
    %641 = vmatpush1.bf16.msra.mxu0 %v503
    %642 = vmatprep.subr.bf16.mxu0 0
    %643 = vmatpush2.bf16.msra.mxu0 %v518
    %644 = vmatprep.subr.bf16.mxu0 0
    %645 = vmatpush2.bf16.msra.mxu0 %v517
    %646 = vmatprep.subr.bf16.mxu0 0
    %647 = vmatpush2.bf16.msra.mxu0 %v516
    %648 = vmatprep.subr.bf16.mxu0 0
    %649 = vmatpush2.bf16.msra.mxu0 %v515
    %650 = vmatprep.subr.bf16.mxu0 0
    %651 = vmatpush2.bf16.msra.mxu0 %v514
    %652 = vmatprep.subr.bf16.mxu0 0
    %653 = vmatpush2.bf16.msra.mxu0 %v513
    %654 = vmatprep.subr.bf16.mxu0 0
    %655 = vmatpush2.bf16.msra.mxu0 %v512
    %656 = vmatprep.subr.bf16.mxu0 0
    %657 = vmatpush2.bf16.msra.mxu0 %v511
    %658 = vmatprep.mubr.bf16.mxu0 %v147
    %659 = vmatmul.mubr.bf16.gmra.mxu0 %v146
    %v660 = vpop.f32.mrf.mxu0
    %v661 = vadd.f32 %v305, %v660
    %v662 = vpop.f32.mrf.mxu0
    %v663 = vpop.f32.mrf.mxu0
    %v664 = vadd.f32 %v305, %v663
    %v665 = vpop.f32.mrf.mxu0
    %666 = vmatprep.mubr.bf16.mxu0 %v154
    %667 = vmatmul.mubr.bf16.gmra.mxu0 %v153
    %v668 = vpop.f32.mrf.mxu0
    %v669 = vadd.f32 %v305, %v668
    %v670 = vpop.f32.mrf.mxu0
    %v671 = vpop.f32.mrf.mxu0
    %v672 = vadd.f32 %v305, %v671
    %v673 = vpop.f32.mrf.mxu0
    %674 = vmatprep.mubr.bf16.mxu0 %v161
    %675 = vmatmul.mubr.bf16.gmra.mxu0 %v160
    %v676 = vpop.f32.mrf.mxu0
    %v677 = vadd.f32 %v305, %v676
    %v678 = vpop.f32.mrf.mxu0
    %v679 = vpop.f32.mrf.mxu0
    %v680 = vadd.f32 %v305, %v679
    %v681 = vpop.f32.mrf.mxu0
    %682 = vmatprep.mubr.bf16.mxu0 %v168
    %683 = vmatmul.mubr.bf16.gmra.mxu0 %v167
    %v684 = vpop.f32.mrf.mxu0
    %v685 = vadd.f32 %v305, %v684
    %v686 = vpop.f32.mrf.mxu0
    %v687 = vpop.f32.mrf.mxu0
    %v688 = vadd.f32 %v305, %v687
    %v689 = vpop.f32.mrf.mxu0
    %690 = vmatprep.mubr.bf16.mxu0 %v175
    %691 = vmatmul.mubr.bf16.gmra.mxu0 %v174
    %v692 = vpop.f32.mrf.mxu0
    %v693 = vadd.f32 %v305, %v692
    %v694 = vpop.f32.mrf.mxu0
    %v695 = vpop.f32.mrf.mxu0
    %v696 = vadd.f32 %v305, %v695
    %v697 = vpop.f32.mrf.mxu0
    %698 = vmatprep.mubr.bf16.mxu0 %v182
    %699 = vmatmul.mubr.bf16.gmra.mxu0 %v181
    %v700 = vpop.f32.mrf.mxu0
    %v701 = vadd.f32 %v305, %v700
    %v702 = vpop.f32.mrf.mxu0
    %v703 = vpop.f32.mrf.mxu0
    %v704 = vadd.f32 %v305, %v703
    %v705 = vpop.f32.mrf.mxu0
    %706 = vmatprep.mubr.bf16.mxu0 %v189
    %707 = vmatmul.mubr.bf16.gmra.mxu0 %v188
    %v708 = vpop.f32.mrf.mxu0
    %v709 = vadd.f32 %v305, %v708
    %v710 = vpop.f32.mrf.mxu0
    %v711 = vpop.f32.mrf.mxu0
    %v712 = vadd.f32 %v305, %v711
    %v713 = vpop.f32.mrf.mxu0
    %714 = vmatprep.mubr.bf16.mxu0 %v196
    %715 = vmatmul.mubr.bf16.gmra.mxu0 %v195
    %v716 = vpop.f32.mrf.mxu0
    %v717 = vadd.f32 %v305, %v716
    %v718 = vpop.f32.mrf.mxu0
    %v719 = vpop.f32.mrf.mxu0
    %v720 = vadd.f32 %v305, %v719
    %v721 = vpop.f32.mrf.mxu0
    %722 = vdwg.mxu0
    %723 = vmatprep.subr.bf16.mxu0 0
    %724 = vmatpush1.bf16.msra.mxu0 %v526
    %725 = vmatprep.subr.bf16.mxu0 0
    %726 = vmatpush1.bf16.msra.mxu0 %v525
    %727 = vmatprep.subr.bf16.mxu0 0
    %728 = vmatpush1.bf16.msra.mxu0 %v524
    %729 = vmatprep.subr.bf16.mxu0 0
    %730 = vmatpush1.bf16.msra.mxu0 %v523
    %731 = vmatprep.subr.bf16.mxu0 0
    %732 = vmatpush1.bf16.msra.mxu0 %v522
    %733 = vmatprep.subr.bf16.mxu0 0
    %734 = vmatpush1.bf16.msra.mxu0 %v521
    %735 = vmatprep.subr.bf16.mxu0 0
    %736 = vmatpush1.bf16.msra.mxu0 %v520
    %737 = vmatprep.subr.bf16.mxu0 0
    %738 = vmatpush1.bf16.msra.mxu0 %v519
    %739 = vmatprep.subr.bf16.mxu0 0
    %740 = vmatpush2.bf16.msra.mxu0 %v534
    %741 = vmatprep.subr.bf16.mxu0 0
    %742 = vmatpush2.bf16.msra.mxu0 %v533
    %743 = vmatprep.subr.bf16.mxu0 0
    %744 = vmatpush2.bf16.msra.mxu0 %v532
    %745 = vmatprep.subr.bf16.mxu0 0
    %746 = vmatpush2.bf16.msra.mxu0 %v531
    %747 = vmatprep.subr.bf16.mxu0 0
    %748 = vmatpush2.bf16.msra.mxu0 %v530
    %749 = vmatprep.subr.bf16.mxu0 0
    %750 = vmatpush2.bf16.msra.mxu0 %v529
    %751 = vmatprep.subr.bf16.mxu0 0
    %752 = vmatpush2.bf16.msra.mxu0 %v528
    %753 = vmatprep.subr.bf16.mxu0 0
    %754 = vmatpush2.bf16.msra.mxu0 %v527
    %755 = vmatprep.mubr.bf16.mxu0 %v149
    %756 = vmatmul.mubr.bf16.gmra.mxu0 %v148
    %v757 = vpop.f32.mrf.mxu0
    %v758 = vadd.f32 %v661, %v757
    %v759 = vpop.f32.mrf.mxu0
    %v760 = vpop.f32.mrf.mxu0
    %v761 = vadd.f32 %v664, %v760
    %v762 = vpop.f32.mrf.mxu0
    %763 = vmatprep.mubr.bf16.mxu0 %v156
    %764 = vmatmul.mubr.bf16.gmra.mxu0 %v155
    %v765 = vpop.f32.mrf.mxu0
    %v766 = vadd.f32 %v669, %v765
    %v767 = vpop.f32.mrf.mxu0
    %v768 = vpop.f32.mrf.mxu0
    %v769 = vadd.f32 %v672, %v768
    %v770 = vpop.f32.mrf.mxu0
    %771 = vmatprep.mubr.bf16.mxu0 %v163
    %772 = vmatmul.mubr.bf16.gmra.mxu0 %v162
    %v773 = vpop.f32.mrf.mxu0
    %v774 = vadd.f32 %v677, %v773
    %v775 = vpop.f32.mrf.mxu0
    %v776 = vpop.f32.mrf.mxu0
    %v777 = vadd.f32 %v680, %v776
    %v778 = vpop.f32.mrf.mxu0
    %779 = vmatprep.mubr.bf16.mxu0 %v170
    %780 = vmatmul.mubr.bf16.gmra.mxu0 %v169
    %v781 = vpop.f32.mrf.mxu0
    %v782 = vadd.f32 %v685, %v781
    %v783 = vpop.f32.mrf.mxu0
    %v784 = vpop.f32.mrf.mxu0
    %v785 = vadd.f32 %v688, %v784
    %v786 = vpop.f32.mrf.mxu0
    %787 = vmatprep.mubr.bf16.mxu0 %v177
    %788 = vmatmul.mubr.bf16.gmra.mxu0 %v176
    %v789 = vpop.f32.mrf.mxu0
    %v790 = vadd.f32 %v693, %v789
    %v791 = vpop.f32.mrf.mxu0
    %v792 = vpop.f32.mrf.mxu0
    %v793 = vadd.f32 %v696, %v792
    %v794 = vpop.f32.mrf.mxu0
    %795 = vmatprep.mubr.bf16.mxu0 %v184
    %796 = vmatmul.mubr.bf16.gmra.mxu0 %v183
    %v797 = vpop.f32.mrf.mxu0
    %v798 = vadd.f32 %v701, %v797
    %v799 = vpop.f32.mrf.mxu0
    %v800 = vpop.f32.mrf.mxu0
    %v801 = vadd.f32 %v704, %v800
    %v802 = vpop.f32.mrf.mxu0
    %803 = vmatprep.mubr.bf16.mxu0 %v191
    %804 = vmatmul.mubr.bf16.gmra.mxu0 %v190
    %v805 = vpop.f32.mrf.mxu0
    %v806 = vadd.f32 %v709, %v805
    %v807 = vpop.f32.mrf.mxu0
    %v808 = vpop.f32.mrf.mxu0
    %v809 = vadd.f32 %v712, %v808
    %v810 = vpop.f32.mrf.mxu0
    %811 = vmatprep.mubr.bf16.mxu0 %v198
    %812 = vmatmul.mubr.bf16.gmra.mxu0 %v197
    %v813 = vpop.f32.mrf.mxu0
    %v814 = vadd.f32 %v717, %v813
    %v815 = vpop.f32.mrf.mxu0
    %v816 = vpop.f32.mrf.mxu0
    %v817 = vadd.f32 %v720, %v816
    %v818 = vpop.f32.mrf.mxu0
    %819 = vdwg.mxu0
    %820 = vmatprep.subr.bf16.mxu0 0
    %821 = vmatpush1.bf16.msra.mxu0 %v542
    %822 = vmatprep.subr.bf16.mxu0 0
    %823 = vmatpush1.bf16.msra.mxu0 %v541
    %824 = vmatprep.subr.bf16.mxu0 0
    %825 = vmatpush1.bf16.msra.mxu0 %v540
    %826 = vmatprep.subr.bf16.mxu0 0
    %827 = vmatpush1.bf16.msra.mxu0 %v539
    %828 = vmatprep.subr.bf16.mxu0 0
    %829 = vmatpush1.bf16.msra.mxu0 %v538
    %830 = vmatprep.subr.bf16.mxu0 0
    %831 = vmatpush1.bf16.msra.mxu0 %v537
    %832 = vmatprep.subr.bf16.mxu0 0
    %833 = vmatpush1.bf16.msra.mxu0 %v536
    %834 = vmatprep.subr.bf16.mxu0 0
    %835 = vmatpush1.bf16.msra.mxu0 %v535
    %836 = vmatprep.subr.bf16.mxu0 0
    %837 = vmatpush2.bf16.msra.mxu0 %v550
    %838 = vmatprep.subr.bf16.mxu0 0
    %839 = vmatpush2.bf16.msra.mxu0 %v549
    %840 = vmatprep.subr.bf16.mxu0 0
    %841 = vmatpush2.bf16.msra.mxu0 %v548
    %842 = vmatprep.subr.bf16.mxu0 0
    %843 = vmatpush2.bf16.msra.mxu0 %v547
    %844 = vmatprep.subr.bf16.mxu0 0
    %845 = vmatpush2.bf16.msra.mxu0 %v546
    %846 = vmatprep.subr.bf16.mxu0 0
    %847 = vmatpush2.bf16.msra.mxu0 %v545
    %848 = vmatprep.subr.bf16.mxu0 0
    %849 = vmatpush2.bf16.msra.mxu0 %v544
    %850 = vmatprep.subr.bf16.mxu0 0
    %851 = vmatpush2.bf16.msra.mxu0 %v543
    %852 = vmatprep.mubr.bf16.mxu0 %v151
    %853 = vmatmul.mubr.bf16.gmra.mxu0 %v150
    %v854 = vpop.f32.mrf.mxu0
    %v855 = vadd.f32 %v758, %v854
    %v856 = vpop.f32.mrf.mxu0
    %v857 = vpop.f32.mrf.mxu0
    %v858 = vadd.f32 %v761, %v857
    %v859 = vpop.f32.mrf.mxu0
    %860 = vmatprep.mubr.bf16.mxu0 %v158
    %861 = vmatmul.mubr.bf16.gmra.mxu0 %v157
    %v862 = vpop.f32.mrf.mxu0
    %v863 = vadd.f32 %v766, %v862
    %v864 = vpop.f32.mrf.mxu0
    %v865 = vpop.f32.mrf.mxu0
    %v866 = vadd.f32 %v769, %v865
    %v867 = vpop.f32.mrf.mxu0
    %868 = vmatprep.mubr.bf16.mxu0 %v165
    %869 = vmatmul.mubr.bf16.gmra.mxu0 %v164
    %v870 = vpop.f32.mrf.mxu0
    %v871 = vadd.f32 %v774, %v870
    %v872 = vpop.f32.mrf.mxu0
    %v873 = vpop.f32.mrf.mxu0
    %v874 = vadd.f32 %v777, %v873
    %v875 = vpop.f32.mrf.mxu0
    %876 = vmatprep.mubr.bf16.mxu0 %v172
    %877 = vmatmul.mubr.bf16.gmra.mxu0 %v171
    %v878 = vpop.f32.mrf.mxu0
    %v879 = vadd.f32 %v782, %v878
    %v880 = vpop.f32.mrf.mxu0
    %v881 = vpop.f32.mrf.mxu0
    %v882 = vadd.f32 %v785, %v881
    %v883 = vpop.f32.mrf.mxu0
    %884 = vmatprep.mubr.bf16.mxu0 %v179
    %885 = vmatmul.mubr.bf16.gmra.mxu0 %v178
    %v886 = vpop.f32.mrf.mxu0
    %v887 = vadd.f32 %v790, %v886
    %v888 = vpop.f32.mrf.mxu0
    %v889 = vpop.f32.mrf.mxu0
    %v890 = vadd.f32 %v793, %v889
    %v891 = vpop.f32.mrf.mxu0
    %892 = vmatprep.mubr.bf16.mxu0 %v186
    %893 = vmatmul.mubr.bf16.gmra.mxu0 %v185
    %v894 = vpop.f32.mrf.mxu0
    %v895 = vadd.f32 %v798, %v894
    %v896 = vpop.f32.mrf.mxu0
    %v897 = vpop.f32.mrf.mxu0
    %v898 = vadd.f32 %v801, %v897
    %v899 = vpop.f32.mrf.mxu0
    %900 = vmatprep.mubr.bf16.mxu0 %v193
    %901 = vmatmul.mubr.bf16.gmra.mxu0 %v192
    %v902 = vpop.f32.mrf.mxu0
    %v903 = vadd.f32 %v806, %v902
    %v904 = vpop.f32.mrf.mxu0
    %v905 = vpop.f32.mrf.mxu0
    %v906 = vadd.f32 %v809, %v905
    %v907 = vpop.f32.mrf.mxu0
    %908 = vmatprep.mubr.bf16.mxu0 %v200
    %909 = vmatmul.mubr.bf16.gmra.mxu0 %v199
    %v910 = vpop.f32.mrf.mxu0
    %v911 = vadd.f32 %v814, %v910
    %v912 = vpop.f32.mrf.mxu0
    %v913 = vpop.f32.mrf.mxu0
    %v914 = vadd.f32 %v817, %v913
    %v915 = vpop.f32.mrf.mxu0
    %916 = vdwg.mxu0
    %917 = vmatprep.subr.bf16.mxu0 0
    %918 = vmatpush1.bf16.msra.mxu0 0
    %919 = vmatprep.subr.bf16.mxu0 0
    %920 = vmatpush1.bf16.msra.mxu0 0
    %921 = vmatprep.subr.bf16.mxu0 0
    %922 = vmatpush1.bf16.msra.mxu0 0
    %923 = vmatprep.subr.bf16.mxu0 0
    %924 = vmatpush1.bf16.msra.mxu0 0
    %925 = vmatprep.subr.bf16.mxu0 0
    %926 = vmatpush1.bf16.msra.mxu0 0
    %927 = vmatprep.subr.bf16.mxu0 0
    %928 = vmatpush1.bf16.msra.mxu0 0
    %929 = vmatprep.subr.bf16.mxu0 0
    %930 = vmatpush1.bf16.msra.mxu0 0
    %931 = vmatprep.subr.bf16.mxu0 0
    %932 = vmatpush1.bf16.msra.mxu0 %v551
    %933 = vmatprep.subr.bf16.mxu0 0
    %934 = vmatpush2.bf16.msra.mxu0 0
    %935 = vmatprep.subr.bf16.mxu0 0
    %936 = vmatpush2.bf16.msra.mxu0 0
    %937 = vmatprep.subr.bf16.mxu0 0
    %938 = vmatpush2.bf16.msra.mxu0 0
    %939 = vmatprep.subr.bf16.mxu0 0
    %940 = vmatpush2.bf16.msra.mxu0 0
    %941 = vmatprep.subr.bf16.mxu0 0
    %942 = vmatpush2.bf16.msra.mxu0 0
    %943 = vmatprep.subr.bf16.mxu0 0
    %944 = vmatpush2.bf16.msra.mxu0 0
    %945 = vmatprep.subr.bf16.mxu0 0
    %946 = vmatpush2.bf16.msra.mxu0 0
    %947 = vmatprep.subr.bf16.mxu0 0
    %948 = vmatpush2.bf16.msra.mxu0 0
    %949 = vmatprep.mubr.bf16.mxu0 0
    %950 = vmatmul.mubr.bf16.gmra.mxu0 %v603
    %v951 = vpop.f32.mrf.mxu0
    %v952 = vadd.f32 %v855, %v951
    %v953 = vpop.f32.mrf.mxu0
    %v954 = vpop.f32.mrf.mxu0
    %v955 = vadd.f32 %v858, %v954
    %v956 = vpop.f32.mrf.mxu0
    %957 = vmatprep.mubr.bf16.mxu0 0
    %958 = vmatmul.mubr.bf16.gmra.mxu0 %v606
    %v959 = vpop.f32.mrf.mxu0
    %v960 = vadd.f32 %v863, %v959
    %v961 = vpop.f32.mrf.mxu0
    %v962 = vpop.f32.mrf.mxu0
    %v963 = vadd.f32 %v866, %v962
    %v964 = vpop.f32.mrf.mxu0
    %965 = vmatprep.mubr.bf16.mxu0 0
    %966 = vmatmul.mubr.bf16.gmra.mxu0 %v609
    %v967 = vpop.f32.mrf.mxu0
    %v968 = vadd.f32 %v871, %v967
    %v969 = vpop.f32.mrf.mxu0
    %v970 = vpop.f32.mrf.mxu0
    %v971 = vadd.f32 %v874, %v970
    %v972 = vpop.f32.mrf.mxu0
    %973 = vmatprep.mubr.bf16.mxu0 0
    %974 = vmatmul.mubr.bf16.gmra.mxu0 %v612
    %v975 = vpop.f32.mrf.mxu0
    %v976 = vadd.f32 %v879, %v975
    %v977 = vpop.f32.mrf.mxu0
    %v978 = vpop.f32.mrf.mxu0
    %v979 = vadd.f32 %v882, %v978
    %v980 = vpop.f32.mrf.mxu0
    %981 = vmatprep.mubr.bf16.mxu0 0
    %982 = vmatmul.mubr.bf16.gmra.mxu0 %v615
    %v983 = vpop.f32.mrf.mxu0
    %v984 = vadd.f32 %v887, %v983
    %v985 = vpop.f32.mrf.mxu0
    %v986 = vpop.f32.mrf.mxu0
    %v987 = vadd.f32 %v890, %v986
    %v988 = vpop.f32.mrf.mxu0
    %989 = vmatprep.mubr.bf16.mxu0 0
    %990 = vmatmul.mubr.bf16.gmra.mxu0 %v618
    %v991 = vpop.f32.mrf.mxu0
    %v992 = vadd.f32 %v895, %v991
    %v993 = vpop.f32.mrf.mxu0
    %v994 = vpop.f32.mrf.mxu0
    %v995 = vadd.f32 %v898, %v994
    %v996 = vpop.f32.mrf.mxu0
    %997 = vmatprep.mubr.bf16.mxu0 0
    %998 = vmatmul.mubr.bf16.gmra.mxu0 %v621
    %v999 = vpop.f32.mrf.mxu0
    %v1000 = vadd.f32 %v903, %v999
    %v1001 = vpop.f32.mrf.mxu0
    %v1002 = vpop.f32.mrf.mxu0
    %v1003 = vadd.f32 %v906, %v1002
    %v1004 = vpop.f32.mrf.mxu0
    %1005 = vmatprep.mubr.bf16.mxu0 0
    %1006 = vmatmul.mubr.bf16.gmra.mxu0 %v624
    %v1007 = vpop.f32.mrf.mxu0
    %v1008 = vadd.f32 %v911, %v1007
    %v1009 = vpop.f32.mrf.mxu0
    %v1010 = vpop.f32.mrf.mxu0
    %v1011 = vadd.f32 %v914, %v1010
    %v1012 = vpop.f32.mrf.mxu0
    %1013 = vdwg.mxu0
    %v1014 = vmax.f32 %v952, 0.0
    %v1015 = vmax.f32 %v955, 0.0
    %v1016 = vmax.f32 %v960, 0.0
    %v1017 = vmax.f32 %v963, 0.0
    %v1018 = vmax.f32 %v968, 0.0
    %v1019 = vmax.f32 %v971, 0.0
    %v1020 = vmax.f32 %v976, 0.0
    %v1021 = vmax.f32 %v979, 0.0
    %v1022 = vmax.f32 %v984, 0.0
    %v1023 = vmax.f32 %v987, 0.0
    %v1024 = vmax.f32 %v992, 0.0
    %v1025 = vmax.f32 %v995, 0.0
    %v1026 = vmax.f32 %v1000, 0.0
    %v1027 = vmax.f32 %v1003, 0.0
    %v1028 = vmax.f32 %v1008, 0.0
    %v1029 = vmax.f32 %v1011, 0.0
    %v1030 = vpack.c.bf16 %v1015, %v1014
    %v1031 = vpack.c.bf16 %v1017, %v1016
    %v1032 = vpack.c.bf16 %v1019, %v1018
    %v1033 = vpack.c.bf16 %v1021, %v1020
    %v1034 = vpack.c.bf16 %v1023, %v1022
    %v1035 = vpack.c.bf16 %v1025, %v1024
    %v1036 = vpack.c.bf16 %v1027, %v1026
    %v1037 = vpack.c.bf16 %v1029, %v1028
    %v1038 = vld [vmem:[%s3] sm:$0xf]
    %v1039 = vld [vmem:[%s3 + $0x4] sm:$0xf]
    %v1040 = vld [vmem:[%s3 + $0x8] sm:$0xf]
    %v1041 = vld [vmem:[%s3 + $0xc] sm:$0xf]
    %v1042 = vld [vmem:[%s3 + $0x10] sm:$0xf]
    %v1043 = vld [vmem:[%s3 + $0x14] sm:$0xf]
    %v1044 = vld [vmem:[%s3 + $0x18] sm:$0xf]
    %v1045 = vld [vmem:[%s3 + $0x1c] sm:$0xf]
    %v1046 = vld [vmem:[%s3 + $0x20] sm:$0xf]
    %v1047 = vld [vmem:[%s3 + $0x24] sm:$0xf]
    %v1048 = vld [vmem:[%s3 + $0x28] sm:$0xf]
    %v1049 = vld [vmem:[%s3 + $0x2c] sm:$0xf]
    %v1050 = vld [vmem:[%s3 + $0x30] sm:$0xf]
    %v1051 = vld [vmem:[%s3 + $0x34] sm:$0xf]
    %v1052 = vld [vmem:[%s3 + $0x38] sm:$0xf]
    %v1053 = vld [vmem:[%s3 + $0x3c] sm:$0xf]
    %v1054 = vld [vmem:[%s4] sm:$0x1]
    %v1056 = vlaneseq
    %v1057 = vshrl.u32 %v1056, 7
    %v1058 = vsub.s32 0, %v1057
    %v1059 = vrot.slane %v1054, %v1058
    %v1077 = vunpack.c.l.b16 %v1038
    %v1078 = vunpack.c.l.b16 %v1039
    %v1079 = vunpack.c.l.b16 %v1040
    %v1080 = vunpack.c.l.b16 %v1041
    %v1081 = vunpack.c.l.b16 %v1042
    %v1082 = vunpack.c.l.b16 %v1043
    %v1083 = vunpack.c.l.b16 %v1044
    %v1084 = vunpack.c.l.b16 %v1045
    %v1085 = vunpack.c.l.b16 %v1046
    %v1086 = vunpack.c.l.b16 %v1047
    %v1087 = vunpack.c.l.b16 %v1048
    %v1088 = vunpack.c.l.b16 %v1049
    %v1089 = vunpack.c.l.b16 %v1050
    %v1090 = vunpack.c.l.b16 %v1051
    %v1091 = vunpack.c.l.b16 %v1052
    %v1092 = vunpack.c.l.b16 %v1053
    %v1093 = vpack.c.b16 %v1078, %v1077
    %v1094 = vpack.c.b16 %v1080, %v1079
    %v1095 = vpack.c.b16 %v1082, %v1081
    %v1096 = vpack.c.b16 %v1084, %v1083
    %v1097 = vpack.c.b16 %v1086, %v1085
    %v1098 = vpack.c.b16 %v1088, %v1087
    %v1099 = vpack.c.b16 %v1090, %v1089
    %v1100 = vpack.c.b16 %v1092, %v1091
    %1109 = vmatprep.subr.bf16.mxu0 0
    %1110 = vmatpush1.bf16.msra.mxu0 %v1100
    %1111 = vmatprep.subr.bf16.mxu0 0
    %1112 = vmatpush1.bf16.msra.mxu0 %v1099
    %1113 = vmatprep.subr.bf16.mxu0 0
    %1114 = vmatpush1.bf16.msra.mxu0 %v1098
    %1115 = vmatprep.subr.bf16.mxu0 0
    %1116 = vmatpush1.bf16.msra.mxu0 %v1097
    %1117 = vmatprep.subr.bf16.mxu0 0
    %1118 = vmatpush1.bf16.msra.mxu0 %v1096
    %1119 = vmatprep.subr.bf16.mxu0 0
    %1120 = vmatpush1.bf16.msra.mxu0 %v1095
    %1121 = vmatprep.subr.bf16.mxu0 0
    %1122 = vmatpush1.bf16.msra.mxu0 %v1094
    %1123 = vmatprep.subr.bf16.mxu0 0
    %1124 = vmatpush1.bf16.msra.mxu0 %v1093
    %1125 = vmatprep.subr.bf16.mxu0 0
    %1126 = vmatpush2.bf16.msra.mxu0 0
    %1127 = vmatprep.subr.bf16.mxu0 0
    %1128 = vmatpush2.bf16.msra.mxu0 0
    %1129 = vmatprep.subr.bf16.mxu0 0
    %1130 = vmatpush2.bf16.msra.mxu0 0
    %1131 = vmatprep.subr.bf16.mxu0 0
    %1132 = vmatpush2.bf16.msra.mxu0 0
    %1133 = vmatprep.subr.bf16.mxu0 0
    %1134 = vmatpush2.bf16.msra.mxu0 0
    %1135 = vmatprep.subr.bf16.mxu0 0
    %1136 = vmatpush2.bf16.msra.mxu0 0
    %1137 = vmatprep.subr.bf16.mxu0 0
    %1138 = vmatpush2.bf16.msra.mxu0 0
    %1139 = vmatprep.subr.bf16.mxu0 0
    %1140 = vmatpush2.bf16.msra.mxu0 0
    %1141 = vmatprep.mubr.bf16.mxu0 0
    %1142 = vmatmul.mubr.bf16.gmra.mxu0 %v1030
    %v1143 = vpop.f32.mrf.mxu0
    %v1144 = vadd.f32 %v1059, %v1143
    %v1145 = vpop.f32.mrf.mxu0
    %v1146 = vpop.f32.mrf.mxu0
    %v1147 = vadd.f32 %v1059, %v1146
    %v1148 = vpop.f32.mrf.mxu0
    %1149 = vmatprep.mubr.bf16.mxu0 0
    %1150 = vmatmul.mubr.bf16.gmra.mxu0 %v1031
    %v1151 = vpop.f32.mrf.mxu0
    %v1152 = vadd.f32 %v1059, %v1151
    %v1153 = vpop.f32.mrf.mxu0
    %v1154 = vpop.f32.mrf.mxu0
    %v1155 = vadd.f32 %v1059, %v1154
    %v1156 = vpop.f32.mrf.mxu0
    %1157 = vmatprep.mubr.bf16.mxu0 0
    %1158 = vmatmul.mubr.bf16.gmra.mxu0 %v1032
    %v1159 = vpop.f32.mrf.mxu0
    %v1160 = vadd.f32 %v1059, %v1159
    %v1161 = vpop.f32.mrf.mxu0
    %v1162 = vpop.f32.mrf.mxu0
    %v1163 = vadd.f32 %v1059, %v1162
    %v1164 = vpop.f32.mrf.mxu0
    %1165 = vmatprep.mubr.bf16.mxu0 0
    %1166 = vmatmul.mubr.bf16.gmra.mxu0 %v1033
    %v1167 = vpop.f32.mrf.mxu0
    %v1168 = vadd.f32 %v1059, %v1167
    %v1169 = vpop.f32.mrf.mxu0
    %v1170 = vpop.f32.mrf.mxu0
    %v1171 = vadd.f32 %v1059, %v1170
    %v1172 = vpop.f32.mrf.mxu0
    %1173 = vmatprep.mubr.bf16.mxu0 0
    %1174 = vmatmul.mubr.bf16.gmra.mxu0 %v1034
    %v1175 = vpop.f32.mrf.mxu0
    %v1176 = vadd.f32 %v1059, %v1175
    %v1177 = vpop.f32.mrf.mxu0
    %v1178 = vpop.f32.mrf.mxu0
    %v1179 = vadd.f32 %v1059, %v1178
    %v1180 = vpop.f32.mrf.mxu0
    %1181 = vmatprep.mubr.bf16.mxu0 0
    %1182 = vmatmul.mubr.bf16.gmra.mxu0 %v1035
    %v1183 = vpop.f32.mrf.mxu0
    %v1184 = vadd.f32 %v1059, %v1183
    %v1185 = vpop.f32.mrf.mxu0
    %v1186 = vpop.f32.mrf.mxu0
    %v1187 = vadd.f32 %v1059, %v1186
    %v1188 = vpop.f32.mrf.mxu0
    %1189 = vmatprep.mubr.bf16.mxu0 0
    %1190 = vmatmul.mubr.bf16.gmra.mxu0 %v1036
    %v1191 = vpop.f32.mrf.mxu0
    %v1192 = vadd.f32 %v1059, %v1191
    %v1193 = vpop.f32.mrf.mxu0
    %v1194 = vpop.f32.mrf.mxu0
    %v1195 = vadd.f32 %v1059, %v1194
    %v1196 = vpop.f32.mrf.mxu0
    %1197 = vmatprep.mubr.bf16.mxu0 0
    %1198 = vmatmul.mubr.bf16.gmra.mxu0 %v1037
    %v1199 = vpop.f32.mrf.mxu0
    %v1200 = vadd.f32 %v1059, %v1199
    %v1201 = vpop.f32.mrf.mxu0
    %v1202 = vpop.f32.mrf.mxu0
    %v1203 = vadd.f32 %v1059, %v1202
    %v1204 = vpop.f32.mrf.mxu0
    %1205 = vdwg.mxu0
    %v1206 = vmax.f32 %v1144, 0.0
    %v1207 = vmax.f32 %v1147, 0.0
    %v1208 = vmax.f32 %v1152, 0.0
    %v1209 = vmax.f32 %v1155, 0.0
    %v1210 = vmax.f32 %v1160, 0.0
    %v1211 = vmax.f32 %v1163, 0.0
    %v1212 = vmax.f32 %v1168, 0.0
    %v1213 = vmax.f32 %v1171, 0.0
    %v1214 = vmax.f32 %v1176, 0.0
    %v1215 = vmax.f32 %v1179, 0.0
    %v1216 = vmax.f32 %v1184, 0.0
    %v1217 = vmax.f32 %v1187, 0.0
    %v1218 = vmax.f32 %v1192, 0.0
    %v1219 = vmax.f32 %v1195, 0.0
    %v1220 = vmax.f32 %v1200, 0.0
    %v1221 = vmax.f32 %v1203, 0.0
    %v1222 = vpack.c.bf16 %v1207, %v1206
    %v1223 = vpack.c.bf16 %v1209, %v1208
    %v1224 = vpack.c.bf16 %v1211, %v1210
    %v1225 = vpack.c.bf16 %v1213, %v1212
    %v1226 = vpack.c.bf16 %v1215, %v1214
    %v1227 = vpack.c.bf16 %v1217, %v1216
    %v1228 = vpack.c.bf16 %v1219, %v1218
    %v1229 = vpack.c.bf16 %v1221, %v1220
    %v1230 = vld [vmem:[%s5] sm:$0xf]
    %v1231 = vld [vmem:[%s5 + $0x4] sm:$0xf]
    %v1232 = vld [vmem:[%s5 + $0x8] sm:$0xf]
    %v1233 = vld [vmem:[%s5 + $0xc] sm:$0xf]
    %v1234 = vld [vmem:[%s5 + $0x10] sm:$0xf]
    %v1235 = vld [vmem:[%s5 + $0x14] sm:$0xf]
    %v1236 = vld [vmem:[%s5 + $0x18] sm:$0xf]
    %v1237 = vld [vmem:[%s5 + $0x1c] sm:$0xf]
    %v1238 = vld [vmem:[%s5 + $0x20] sm:$0xf]
    %v1239 = vld [vmem:[%s5 + $0x24] sm:$0xf]
    %v1240 = vld [vmem:[%s5 + $0x28] sm:$0xf]
    %v1241 = vld [vmem:[%s5 + $0x2c] sm:$0xf]
    %v1242 = vld [vmem:[%s5 + $0x30] sm:$0xf]
    %v1243 = vld [vmem:[%s5 + $0x34] sm:$0xf]
    %v1244 = vld [vmem:[%s5 + $0x38] sm:$0xf]
    %v1245 = vld [vmem:[%s5 + $0x3c] sm:$0xf]
    %v1246 = vld [vmem:[%s6] sm:$0x1]
    %v1248 = vlaneseq
    %v1249 = vshrl.u32 %v1248, 7
    %v1250 = vsub.s32 0, %v1249
    %v1251 = vrot.slane %v1246, %v1250
    %v1269 = vunpack.c.l.b16 %v1230
    %v1270 = vunpack.c.l.b16 %v1231
    %v1271 = vunpack.c.l.b16 %v1232
    %v1272 = vunpack.c.l.b16 %v1233
    %v1273 = vunpack.c.l.b16 %v1234
    %v1274 = vunpack.c.l.b16 %v1235
    %v1275 = vunpack.c.l.b16 %v1236
    %v1276 = vunpack.c.l.b16 %v1237
    %v1277 = vunpack.c.l.b16 %v1238
    %v1278 = vunpack.c.l.b16 %v1239
    %v1279 = vunpack.c.l.b16 %v1240
    %v1280 = vunpack.c.l.b16 %v1241
    %v1281 = vunpack.c.l.b16 %v1242
    %v1282 = vunpack.c.l.b16 %v1243
    %v1283 = vunpack.c.l.b16 %v1244
    %v1284 = vunpack.c.l.b16 %v1245
    %v1285 = vpack.c.b16 %v1270, %v1269
    %v1286 = vpack.c.b16 %v1272, %v1271
    %v1287 = vpack.c.b16 %v1274, %v1273
    %v1288 = vpack.c.b16 %v1276, %v1275
    %v1289 = vpack.c.b16 %v1278, %v1277
    %v1290 = vpack.c.b16 %v1280, %v1279
    %v1291 = vpack.c.b16 %v1282, %v1281
    %v1292 = vpack.c.b16 %v1284, %v1283
    %1301 = vmatprep.subr.bf16.mxu0 0
    %1302 = vmatpush1.bf16.msra.mxu0 %v1292
    %1303 = vmatprep.subr.bf16.mxu0 0
    %1304 = vmatpush1.bf16.msra.mxu0 %v1291
    %1305 = vmatprep.subr.bf16.mxu0 0
    %1306 = vmatpush1.bf16.msra.mxu0 %v1290
    %1307 = vmatprep.subr.bf16.mxu0 0
    %1308 = vmatpush1.bf16.msra.mxu0 %v1289
    %1309 = vmatprep.subr.bf16.mxu0 0
    %1310 = vmatpush1.bf16.msra.mxu0 %v1288
    %1311 = vmatprep.subr.bf16.mxu0 0
    %1312 = vmatpush1.bf16.msra.mxu0 %v1287
    %1313 = vmatprep.subr.bf16.mxu0 0
    %1314 = vmatpush1.bf16.msra.mxu0 %v1286
    %1315 = vmatprep.subr.bf16.mxu0 0
    %1316 = vmatpush1.bf16.msra.mxu0 %v1285
    %1317 = vmatprep.subr.bf16.mxu0 0
    %1318 = vmatpush2.bf16.msra.mxu0 0
    %1319 = vmatprep.subr.bf16.mxu0 0
    %1320 = vmatpush2.bf16.msra.mxu0 0
    %1321 = vmatprep.subr.bf16.mxu0 0
    %1322 = vmatpush2.bf16.msra.mxu0 0
    %1323 = vmatprep.subr.bf16.mxu0 0
    %1324 = vmatpush2.bf16.msra.mxu0 0
    %1325 = vmatprep.subr.bf16.mxu0 0
    %1326 = vmatpush2.bf16.msra.mxu0 0
    %1327 = vmatprep.subr.bf16.mxu0 0
    %1328 = vmatpush2.bf16.msra.mxu0 0
    %1329 = vmatprep.subr.bf16.mxu0 0
    %1330 = vmatpush2.bf16.msra.mxu0 0
    %1331 = vmatprep.subr.bf16.mxu0 0
    %1332 = vmatpush2.bf16.msra.mxu0 0
    %1333 = vmatprep.mubr.bf16.mxu0 0
    %1334 = vmatmul.mubr.bf16.gmra.mxu0 %v1222
    %v1335 = vpop.f32.mrf.mxu0
    %v1336 = vadd.f32 %v1251, %v1335
    %v1337 = vpop.f32.mrf.mxu0
    %v1338 = vpop.f32.mrf.mxu0
    %v1339 = vadd.f32 %v1251, %v1338
    %v1340 = vpop.f32.mrf.mxu0
    %1341 = vmatprep.mubr.bf16.mxu0 0
    %1342 = vmatmul.mubr.bf16.gmra.mxu0 %v1223
    %v1343 = vpop.f32.mrf.mxu0
    %v1344 = vadd.f32 %v1251, %v1343
    %v1345 = vpop.f32.mrf.mxu0
    %v1346 = vpop.f32.mrf.mxu0
    %v1347 = vadd.f32 %v1251, %v1346
    %v1348 = vpop.f32.mrf.mxu0
    %1349 = vmatprep.mubr.bf16.mxu0 0
    %1350 = vmatmul.mubr.bf16.gmra.mxu0 %v1224
    %v1351 = vpop.f32.mrf.mxu0
    %v1352 = vadd.f32 %v1251, %v1351
    %v1353 = vpop.f32.mrf.mxu0
    %v1354 = vpop.f32.mrf.mxu0
    %v1355 = vadd.f32 %v1251, %v1354
    %v1356 = vpop.f32.mrf.mxu0
    %1357 = vmatprep.mubr.bf16.mxu0 0
    %1358 = vmatmul.mubr.bf16.gmra.mxu0 %v1225
    %v1359 = vpop.f32.mrf.mxu0
    %v1360 = vadd.f32 %v1251, %v1359
    %v1361 = vpop.f32.mrf.mxu0
    %v1362 = vpop.f32.mrf.mxu0
    %v1363 = vadd.f32 %v1251, %v1362
    %v1364 = vpop.f32.mrf.mxu0
    %1365 = vmatprep.mubr.bf16.mxu0 0
    %1366 = vmatmul.mubr.bf16.gmra.mxu0 %v1226
    %v1367 = vpop.f32.mrf.mxu0
    %v1368 = vadd.f32 %v1251, %v1367
    %v1369 = vpop.f32.mrf.mxu0
    %v1370 = vpop.f32.mrf.mxu0
    %v1371 = vadd.f32 %v1251, %v1370
    %v1372 = vpop.f32.mrf.mxu0
    %1373 = vmatprep.mubr.bf16.mxu0 0
    %1374 = vmatmul.mubr.bf16.gmra.mxu0 %v1227
    %v1375 = vpop.f32.mrf.mxu0
    %v1376 = vadd.f32 %v1251, %v1375
    %v1377 = vpop.f32.mrf.mxu0
    %v1378 = vpop.f32.mrf.mxu0
    %v1379 = vadd.f32 %v1251, %v1378
    %v1380 = vpop.f32.mrf.mxu0
    %1381 = vmatprep.mubr.bf16.mxu0 0
    %1382 = vmatmul.mubr.bf16.gmra.mxu0 %v1228
    %v1383 = vpop.f32.mrf.mxu0
    %v1384 = vadd.f32 %v1251, %v1383
    %v1385 = vpop.f32.mrf.mxu0
    %v1386 = vpop.f32.mrf.mxu0
    %v1387 = vadd.f32 %v1251, %v1386
    %v1388 = vpop.f32.mrf.mxu0
    %1389 = vmatprep.mubr.bf16.mxu0 0
    %1390 = vmatmul.mubr.bf16.gmra.mxu0 %v1229
    %v1391 = vpop.f32.mrf.mxu0
    %v1392 = vadd.f32 %v1251, %v1391
    %v1393 = vpop.f32.mrf.mxu0
    %v1394 = vpop.f32.mrf.mxu0
    %v1395 = vadd.f32 %v1251, %v1394
    %v1396 = vpop.f32.mrf.mxu0
    %1397 = vdwg.mxu0
    %v1398 = vmax.f32 %v1336, 0.0
    %v1399 = vmax.f32 %v1339, 0.0
    %v1400 = vmax.f32 %v1344, 0.0
    %v1401 = vmax.f32 %v1347, 0.0
    %v1402 = vmax.f32 %v1352, 0.0
    %v1403 = vmax.f32 %v1355, 0.0
    %v1404 = vmax.f32 %v1360, 0.0
    %v1405 = vmax.f32 %v1363, 0.0
    %v1406 = vmax.f32 %v1368, 0.0
    %v1407 = vmax.f32 %v1371, 0.0
    %v1408 = vmax.f32 %v1376, 0.0
    %v1409 = vmax.f32 %v1379, 0.0
    %v1410 = vmax.f32 %v1384, 0.0
    %v1411 = vmax.f32 %v1387, 0.0
    %v1412 = vmax.f32 %v1392, 0.0
    %v1413 = vmax.f32 %v1395, 0.0
    %v1414 = vpack.c.bf16 %v1399, %v1398
    %v1415 = vpack.c.bf16 %v1401, %v1400
    %v1416 = vpack.c.bf16 %v1403, %v1402
    %v1417 = vpack.c.bf16 %v1405, %v1404
    %v1418 = vpack.c.bf16 %v1407, %v1406
    %v1419 = vpack.c.bf16 %v1409, %v1408
    %v1420 = vpack.c.bf16 %v1411, %v1410
    %v1421 = vpack.c.bf16 %v1413, %v1412
    %v1422 = vld [vmem:[%s7] sm:$0xf]
    %v1423 = vld [vmem:[%s7 + $0x4] sm:$0xf]
    %v1424 = vld [vmem:[%s7 + $0x8] sm:$0xf]
    %v1425 = vld [vmem:[%s7 + $0xc] sm:$0xf]
    %v1426 = vld [vmem:[%s7 + $0x10] sm:$0xf]
    %v1427 = vld [vmem:[%s7 + $0x14] sm:$0xf]
    %v1428 = vld [vmem:[%s7 + $0x18] sm:$0xf]
    %v1429 = vld [vmem:[%s7 + $0x1c] sm:$0xf]
    %v1430 = vld [vmem:[%s7 + $0x20] sm:$0xf]
    %v1431 = vld [vmem:[%s7 + $0x24] sm:$0xf]
    %v1432 = vld [vmem:[%s7 + $0x28] sm:$0xf]
    %v1433 = vld [vmem:[%s7 + $0x2c] sm:$0xf]
    %v1434 = vld [vmem:[%s7 + $0x30] sm:$0xf]
    %v1435 = vld [vmem:[%s7 + $0x34] sm:$0xf]
    %v1436 = vld [vmem:[%s7 + $0x38] sm:$0xf]
    %v1437 = vld [vmem:[%s7 + $0x3c] sm:$0xf]
    %v1438 = vld [vmem:[%s8] sm:$0x1]
    %v1440 = vlaneseq
    %v1441 = vshrl.u32 %v1440, 7
    %v1442 = vsub.s32 0, %v1441
    %v1443 = vrot.slane %v1438, %v1442
    %v1461 = vunpack.c.l.b16 %v1422
    %v1462 = vunpack.c.l.b16 %v1423
    %v1463 = vunpack.c.l.b16 %v1424
    %v1464 = vunpack.c.l.b16 %v1425
    %v1465 = vunpack.c.l.b16 %v1426
    %v1466 = vunpack.c.l.b16 %v1427
    %v1467 = vunpack.c.l.b16 %v1428
    %v1468 = vunpack.c.l.b16 %v1429
    %v1469 = vunpack.c.l.b16 %v1430
    %v1470 = vunpack.c.l.b16 %v1431
    %v1471 = vunpack.c.l.b16 %v1432
    %v1472 = vunpack.c.l.b16 %v1433
    %v1473 = vunpack.c.l.b16 %v1434
    %v1474 = vunpack.c.l.b16 %v1435
    %v1475 = vunpack.c.l.b16 %v1436
    %v1476 = vunpack.c.l.b16 %v1437
    %v1477 = vpack.c.b16 %v1462, %v1461
    %v1478 = vpack.c.b16 %v1464, %v1463
    %v1479 = vpack.c.b16 %v1466, %v1465
    %v1480 = vpack.c.b16 %v1468, %v1467
    %v1481 = vpack.c.b16 %v1470, %v1469
    %v1482 = vpack.c.b16 %v1472, %v1471
    %v1483 = vpack.c.b16 %v1474, %v1473
    %v1484 = vpack.c.b16 %v1476, %v1475
    %1493 = vmatprep.subr.bf16.mxu0 0
    %1494 = vmatpush1.bf16.msra.mxu0 %v1484
    %1495 = vmatprep.subr.bf16.mxu0 0
    %1496 = vmatpush1.bf16.msra.mxu0 %v1483
    %1497 = vmatprep.subr.bf16.mxu0 0
    %1498 = vmatpush1.bf16.msra.mxu0 %v1482
    %1499 = vmatprep.subr.bf16.mxu0 0
    %1500 = vmatpush1.bf16.msra.mxu0 %v1481
    %1501 = vmatprep.subr.bf16.mxu0 0
    %1502 = vmatpush1.bf16.msra.mxu0 %v1480
    %1503 = vmatprep.subr.bf16.mxu0 0
    %1504 = vmatpush1.bf16.msra.mxu0 %v1479
    %1505 = vmatprep.subr.bf16.mxu0 0
    %1506 = vmatpush1.bf16.msra.mxu0 %v1478
    %1507 = vmatprep.subr.bf16.mxu0 0
    %1508 = vmatpush1.bf16.msra.mxu0 %v1477
    %1509 = vmatprep.subr.bf16.mxu0 0
    %1510 = vmatpush2.bf16.msra.mxu0 0
    %1511 = vmatprep.subr.bf16.mxu0 0
    %1512 = vmatpush2.bf16.msra.mxu0 0
    %1513 = vmatprep.subr.bf16.mxu0 0
    %1514 = vmatpush2.bf16.msra.mxu0 0
    %1515 = vmatprep.subr.bf16.mxu0 0
    %1516 = vmatpush2.bf16.msra.mxu0 0
    %1517 = vmatprep.subr.bf16.mxu0 0
    %1518 = vmatpush2.bf16.msra.mxu0 0
    %1519 = vmatprep.subr.bf16.mxu0 0
    %1520 = vmatpush2.bf16.msra.mxu0 0
    %1521 = vmatprep.subr.bf16.mxu0 0
    %1522 = vmatpush2.bf16.msra.mxu0 0
    %1523 = vmatprep.subr.bf16.mxu0 0
    %1524 = vmatpush2.bf16.msra.mxu0 0
    %1525 = vmatprep.mubr.bf16.mxu0 0
    %1526 = vmatmul.mubr.bf16.gmra.mxu0 %v1414
    %v1527 = vpop.f32.mrf.mxu0
    %v1528 = vadd.f32 %v1443, %v1527
    %v1529 = vpop.f32.mrf.mxu0
    %v1530 = vpop.f32.mrf.mxu0
    %v1531 = vadd.f32 %v1443, %v1530
    %v1532 = vpop.f32.mrf.mxu0
    %1533 = vmatprep.mubr.bf16.mxu0 0
    %1534 = vmatmul.mubr.bf16.gmra.mxu0 %v1415
    %v1535 = vpop.f32.mrf.mxu0
    %v1536 = vadd.f32 %v1443, %v1535
    %v1537 = vpop.f32.mrf.mxu0
    %v1538 = vpop.f32.mrf.mxu0
    %v1539 = vadd.f32 %v1443, %v1538
    %v1540 = vpop.f32.mrf.mxu0
    %1541 = vmatprep.mubr.bf16.mxu0 0
    %1542 = vmatmul.mubr.bf16.gmra.mxu0 %v1416
    %v1543 = vpop.f32.mrf.mxu0
    %v1544 = vadd.f32 %v1443, %v1543
    %v1545 = vpop.f32.mrf.mxu0
    %v1546 = vpop.f32.mrf.mxu0
    %v1547 = vadd.f32 %v1443, %v1546
    %v1548 = vpop.f32.mrf.mxu0
    %1549 = vmatprep.mubr.bf16.mxu0 0
    %1550 = vmatmul.mubr.bf16.gmra.mxu0 %v1417
    %v1551 = vpop.f32.mrf.mxu0
    %v1552 = vadd.f32 %v1443, %v1551
    %v1553 = vpop.f32.mrf.mxu0
    %v1554 = vpop.f32.mrf.mxu0
    %v1555 = vadd.f32 %v1443, %v1554
    %v1556 = vpop.f32.mrf.mxu0
    %1557 = vmatprep.mubr.bf16.mxu0 0
    %1558 = vmatmul.mubr.bf16.gmra.mxu0 %v1418
    %v1559 = vpop.f32.mrf.mxu0
    %v1560 = vadd.f32 %v1443, %v1559
    %v1561 = vpop.f32.mrf.mxu0
    %v1562 = vpop.f32.mrf.mxu0
    %v1563 = vadd.f32 %v1443, %v1562
    %v1564 = vpop.f32.mrf.mxu0
    %1565 = vmatprep.mubr.bf16.mxu0 0
    %1566 = vmatmul.mubr.bf16.gmra.mxu0 %v1419
    %v1567 = vpop.f32.mrf.mxu0
    %v1568 = vadd.f32 %v1443, %v1567
    %v1569 = vpop.f32.mrf.mxu0
    %v1570 = vpop.f32.mrf.mxu0
    %v1571 = vadd.f32 %v1443, %v1570
    %v1572 = vpop.f32.mrf.mxu0
    %1573 = vmatprep.mubr.bf16.mxu0 0
    %1574 = vmatmul.mubr.bf16.gmra.mxu0 %v1420
    %v1575 = vpop.f32.mrf.mxu0
    %v1576 = vadd.f32 %v1443, %v1575
    %v1577 = vpop.f32.mrf.mxu0
    %v1578 = vpop.f32.mrf.mxu0
    %v1579 = vadd.f32 %v1443, %v1578
    %v1580 = vpop.f32.mrf.mxu0
    %1581 = vmatprep.mubr.bf16.mxu0 0
    %1582 = vmatmul.mubr.bf16.gmra.mxu0 %v1421
    %v1583 = vpop.f32.mrf.mxu0
    %v1584 = vadd.f32 %v1443, %v1583
    %v1585 = vpop.f32.mrf.mxu0
    %v1586 = vpop.f32.mrf.mxu0
    %v1587 = vadd.f32 %v1443, %v1586
    %v1588 = vpop.f32.mrf.mxu0
    %1589 = vdwg.mxu0
    %1590 = vst [vmem:[#allocation2] sm:$0xff] %v1528
    %1591 = vst [vmem:[#allocation2 + $0x8] sm:$0xff] %v1531
    %1592 = vst [vmem:[#allocation2 + $0x10] sm:$0xff] %v1536
    %1593 = vst [vmem:[#allocation2 + $0x18] sm:$0xff] %v1539
    %1594 = vst [vmem:[#allocation2 + $0x20] sm:$0xff] %v1544
    %1595 = vst [vmem:[#allocation2 + $0x28] sm:$0xff] %v1547
    %1596 = vst [vmem:[#allocation2 + $0x30] sm:$0xff] %v1552
    %1597 = vst [vmem:[#allocation2 + $0x38] sm:$0xff] %v1555
    %1598 = vst [vmem:[#allocation2 + $0x40] sm:$0xff] %v1560
    %1599 = vst [vmem:[#allocation2 + $0x48] sm:$0xff] %v1563
    %1600 = vst [vmem:[#allocation2 + $0x50] sm:$0xff] %v1568
    %1601 = vst [vmem:[#allocation2 + $0x58] sm:$0xff] %v1571
    %1602 = vst [vmem:[#allocation2 + $0x60] sm:$0xff] %v1576
    %1603 = vst [vmem:[#allocation2 + $0x68] sm:$0xff] %v1579
    %1604 = vst [vmem:[#allocation2 + $0x70] sm:$0xff] %v1584
    %1605 = vst [vmem:[#allocation2 + $0x78] sm:$0xff] %v1587
    // Predicated region
    $region38: #{simple_dnn_forward.1} parent=1 // pred_check
      _
    $region39: #{simple_dnn_forward.1} parent=1 // pred_check_branch
      %1607 = sbr.rel (0) target = $region41
    $region40: #{simple_dnn_forward.1} parent=1 // pred_region
      %s1609 = ssub.s32 2048, 128
      %1610 = vsyncadd [#allocation3], %s1609
      %s1611 = sshll.u32 [#allocation2], 4
      %s1612 = int_to_ptr.vmem [resolvable:$true] %s1611
      %1617 = dma.vmem_to_hbm [thread:$0]  %s1612, 128, %s9, [#allocation3], 128, 128, 8
    $region41: #{simple_dnn_forward.1} parent=1 // pred_fallthru
      _
    // Predicated region
    $region42: #{simple_dnn_forward.1} parent=1 // pred_check
      _
    $region43: #{simple_dnn_forward.1} parent=1 // pred_check_branch
      %1619 = sbr.rel (0) target = $region45
    $region44: #{simple_dnn_forward.1} parent=1 // pred_region
      %1620 = dma.done [#allocation3], 2048
    $region45: #{simple_dnn_forward.1} parent=1 // pred_fallthru
      _
    %1621 = vsyncpa [#allocation3], 1

</llo_original>
